<compile_context>
chip_gen: v7x
topology: tpu7x:2x2x1
jax: 0.10.0
libtpu: 0.0.40
codegen_flags: <defaults>
</compile_context>

<pallas_src>
import functools

import jax
import jax.numpy as jnp
from jax.experimental import pallas as pl
from jax.experimental.pallas import tpu as pltpu


# --------------------------------------------------------------------------- #
# Shared finalize: Gram statistics -> per-batch effective weight / bias.
# Only dot_general patterns proven to lower on Mosaic are used
# (standard (1,)x(0,) matmuls and the LHS-dim0 contraction (((0,), (0,)))).
# --------------------------------------------------------------------------- #
def _fold_weff(g, s, wq, wvT, bq_col, bv_row, aconst, wk, m2, bk, bconst):
    f32 = jnp.float32
    # attention logits from Gram statistics:
    #   A_raw = Wq G Wv^T + (Wq s) bv^T + bq (Wv s)^T + N bq bv^T
    qg = jnp.dot(wq, g, preferred_element_type=f32)                    # (c, plane)
    a = jnp.dot(qg, wvT, preferred_element_type=f32)                   # (c, c)
    qs = jnp.dot(wq, s, preferred_element_type=f32)                    # (c, 1)
    vs_row = jax.lax.dot_general(                                      # (1, c) = (Wv s)^T
        s, wvT, (((0,), (0,)), ((), ())), preferred_element_type=f32)
    a = a + qs * bv_row + bq_col * vs_row + aconst
    # softmax over dim=2 of the original (b, c, c) logits
    a = a - jnp.max(a, axis=-1, keepdims=True)
    e = jnp.exp(a)
    a = e * pl.reciprocal(jnp.sum(e, axis=-1, keepdims=True), approx=False)
    # fold the post-softmax chain (node_k, conv_wg, bn_wg, out conv, ABN scale)
    u = jnp.dot(a, m2, preferred_element_type=f32)                     # (c, plane)
    w_eff = jax.lax.dot_general(                                       # (plane, plane)
        u, wk, (((0,), (0,)), ((), ())), preferred_element_type=f32)
    b_full = jax.lax.dot_general(                                      # (plane, 1)
        u, bk, (((0,), (0,)), ((), ())), preferred_element_type=f32) + bconst
    return w_eff, b_full


# ----------------------------- fused kernel ---------------------------------- #
def _fused_kernel(x_ref,        # (1, plane, N)   compute dtype
                  wq_ref,       # (c, plane)      f32
                  wvT_ref,      # (plane, c)      f32
                  bq_ref,       # (c, 1)          f32
                  bvrow_ref,    # (1, c)          f32
                  aconst_ref,   # (c, c)          f32  N * bq bv^T
                  wk_ref,       # (c, plane)      f32
                  m2_ref,       # (c, plane)      f32  folded Wwg/bn_wg/Wout/ABN
                  bk_ref,       # (c, 1)          f32
                  bconst_ref,   # (plane, 1)      f32  folded bias chain
                  gamma_ref,    # (1,) SMEM       f32
                  o_ref):       # out: (1, plane, N)  out dtype
    x = x_ref[0]                                                   # (plane, N)
    # single pass over the in-VMEM slab: Gram + lane-sum
    g = jax.lax.dot_general(x, x, (((1,), (1,)), ((), ())),
                            preferred_element_type=jnp.float32)    # (plane, plane)
    s = jnp.sum(x.astype(jnp.float32), axis=-1, keepdims=True)     # (plane, 1)
    w_eff, b_full = _fold_weff(g, s, wq_ref[...], wvT_ref[...], bq_ref[...],
                               bvrow_ref[...], aconst_ref[...], wk_ref[...],
                               m2_ref[...], bk_ref[...], bconst_ref[...])
    # phase 2 on the same slab: y = W_eff @ x + b_full, leaky_relu, residual
    y = jnp.dot(w_eff.astype(x.dtype), x,
                preferred_element_type=jnp.float32) + b_full       # (plane, N) f32
    y = jnp.where(y > 0, y, 0.01 * y)        # InPlaceABN default: leaky_relu(0.01)
    o_ref[0] = (gamma_ref[0] * y + x.astype(jnp.float32)).astype(o_ref.dtype)


# ----------------------------- phase 1 kernel -------------------------------- #
def _phase1_kernel(x_ref,       # (1, plane, TN)  compute dtype
                   wq_ref, wvT_ref, bq_ref, bvrow_ref, aconst_ref,
                   wk_ref, m2_ref, bk_ref, bconst_ref,
                   weff_ref,    # out: (1, plane, plane)  compute dtype
                   bfull_ref,   # out: (1, plane, 1)      f32
                   g_acc,       # scratch: (plane, plane) f32
                   s_acc):      # scratch: (plane, 1)     f32
    n = pl.program_id(1)

    @pl.when(n == 0)
    def _init():
        g_acc[...] = jnp.zeros_like(g_acc)
        s_acc[...] = jnp.zeros_like(s_acc)

    # Hot loop: a single MXU op + one XLU lane reduction per tile.
    x = x_ref[0]                                                   # (plane, TN)
    g_acc[...] += jax.lax.dot_general(x, x, (((1,), (1,)), ((), ())),
                                      preferred_element_type=jnp.float32)
    s_acc[...] += jnp.sum(x.astype(jnp.float32), axis=-1, keepdims=True)

    @pl.when(n == pl.num_programs(1) - 1)
    def _finalize():
        w_eff, b_full = _fold_weff(g_acc[...], s_acc[...], wq_ref[...],
                                   wvT_ref[...], bq_ref[...], bvrow_ref[...],
                                   aconst_ref[...], wk_ref[...], m2_ref[...],
                                   bk_ref[...], bconst_ref[...])
        weff_ref[0] = w_eff.astype(weff_ref.dtype)
        bfull_ref[0] = b_full


# ----------------------------- phase 2 kernel -------------------------------- #
def _phase2_kernel(x_ref,       # (1, plane, TN)     compute dtype
                   weff_ref,    # (1, plane, plane)  compute dtype
                   bfull_ref,   # (1, plane, 1)      f32
                   gamma_ref,   # (1,) SMEM          f32
                   o_ref):      # (1, plane, TN)     out dtype
    x = x_ref[0]
    y = jnp.dot(weff_ref[0], x,
                preferred_element_type=jnp.float32) + bfull_ref[0]
    y = jnp.where(y > 0, y, 0.01 * y)
    o_ref[0] = (gamma_ref[0] * y + x.astype(jnp.float32)).astype(o_ref.dtype)


# ------------------------------- wrapper -------------------------------------- #
def _choose_tiling(n, target):
    """Return (n_padded, tn): a 128-aligned tiling of the N axis.

    A single full-N block is used when it fits (no alignment requirement);
    otherwise N is padded up to a multiple of 128 and tn is the largest
    128-aligned divisor of the padded N that is <= target.
    """
    if n <= max(target, 128):
        return n, n
    target = max(128, (target // 128) * 128)
    n_pad = ((n + 127) // 128) * 128
    tn = target
    while tn > 128 and n_pad % tn != 0:
        tn -= 128
    return n_pad, tn


@functools.partial(
    jax.jit,
    static_argnames=("compute_dtype", "out_dtype", "tn_target", "fuse",
                     "fuse_vmem_budget"))
def spatial_gcn_pallas(x_nchw, p, *, compute_dtype=jnp.bfloat16, out_dtype=None,
                       tn_target=2048, fuse=None, fuse_vmem_budget=32 << 20):
    b, plane, h, w = x_nchw.shape
    assert plane % 2 == 0, "plane must be even (inter_plane = plane // 2)"
    c = plane // 2
    N = h * w
    eps = 1e-5
    f32 = jnp.float32
    cdt = jnp.dtype(compute_dtype)
    odt = jnp.dtype(out_dtype) if out_dtype is not None else jnp.dtype(x_nchw.dtype)

    # NCHW -> (B, plane, N): trailing-dims reshape only, no transpose / HBM copy.
    x = x_nchw.reshape(b, plane, N).astype(cdt)

    # ---- host-side constant folding (eval-mode BN / InPlaceABNSync) ----------
    wg_s = p['wg_w'] / jnp.sqrt(p['wg_var'] + eps)           # bn_wg scale
    wg_b = p['wg_b'] - p['wg_mean'] * wg_s                   # bn_wg bias
    abn_s = p['abn_w'] / jnp.sqrt(p['abn_var'] + eps)        # ABN scale
    abn_b = p['abn_b'] - p['abn_mean'] * abn_s               # ABN bias
    # M2[d, p] = abn_s[p] * sum_e Wwg[e, d] * wg_s[e] * Wout[p, e]
    m2 = (((p['wwg'] * wg_s[:, None]).T @ p['wout'].T) * abn_s[None, :]).astype(f32)
    b_const = (abn_s * (wg_b @ p['wout'].T + p['bout'])
               + abn_b).reshape(plane, 1).astype(f32)

    wq = p['wq'].astype(f32)                                  # (c, plane)
    wvT = p['wv'].T.astype(f32)                               # (plane, c)
    wk = p['wk'].astype(f32)                                  # (c, plane)
    bq_col = p['bq'].reshape(c, 1).astype(f32)
    bv_row = p['bv'].reshape(1, c).astype(f32)
    bk_col = p['bk'].reshape(c, 1).astype(f32)
    aconst = (float(N) * jnp.outer(p['bq'], p['bv'])).astype(f32)   # (c, c)
    gamma = p['gamma'].astype(f32)

    weights = (wq, wvT, bq_col, bv_row, aconst, wk, m2, bk_col, b_const)
    w_shapes = tuple(t.shape for t in weights)

    # ---- fuse both passes over x when the per-batch slab fits VMEM -----------
    if fuse is None:
        x_slab = plane * N * cdt.itemsize
        o_slab = plane * N * odt.itemsize
        f32_slab = plane * N * 4
        est = 2 * (x_slab + o_slab) + 4 * f32_slab + (64 << 10)
        fuse = est <= fuse_vmem_budget   # conservative: also fits v7x's 64 MiB VMEM

    if fuse:
        out = pl.pallas_call(
            _fused_kernel,
            out_shape=jax.ShapeDtypeStruct((b, plane, N), odt),
            grid=(b,),
            in_specs=([pl.BlockSpec((1, plane, N), lambda i: (i, 0, 0))]
                      + [pl.BlockSpec(s, lambda i: (0, 0)) for s in w_shapes]
                      + [pl.BlockSpec(memory_space=pltpu.MemorySpace.SMEM)]),
            out_specs=pl.BlockSpec((1, plane, N), lambda i: (i, 0, 0)),
            compiler_params=pltpu.CompilerParams(
                dimension_semantics=("parallel",),
                vmem_limit_bytes=48 << 20),
        )(x, *weights, gamma)
        return out.reshape(b, plane, h, w)

    # ---- fallback: two-phase, N-tiled path for large per-batch slabs ---------
    n_pad, tn = _choose_tiling(N, tn_target)
    if n_pad != N:
        # Zero padding keeps the Gram / lane-sum accumulation exact (the bias
        # constant aconst carries the true N); padded output columns are sliced.
        x = jnp.pad(x, ((0, 0), (0, 0), (0, n_pad - N)))
    n_tiles = n_pad // tn

    # phase 1: accumulate Gram statistics over N-tiles, emit per-batch W_eff
    weff, bfull = pl.pallas_call(
        _phase1_kernel,
        out_shape=(jax.ShapeDtypeStruct((b, plane, plane), cdt),
                   jax.ShapeDtypeStruct((b, plane, 1), jnp.float32)),
        grid=(b, n_tiles),
        in_specs=([pl.BlockSpec((1, plane, tn), lambda i, n: (i, 0, n))]
                  + [pl.BlockSpec(s, lambda i, n: (0, 0)) for s in w_shapes]),
        out_specs=(pl.BlockSpec((1, plane, plane), lambda i, n: (i, 0, 0)),
                   pl.BlockSpec((1, plane, 1), lambda i, n: (i, 0, 0))),
        scratch_shapes=[pltpu.VMEM((plane, plane), jnp.float32),
                        pltpu.VMEM((plane, 1), jnp.float32)],
        compiler_params=pltpu.CompilerParams(
            dimension_semantics=("parallel", "arbitrary"),
            vmem_limit_bytes=48 << 20),
    )(x, *weights)

    # phase 2: per-tile y = W_eff @ x + b_full, leaky_relu, gamma-residual
    out = pl.pallas_call(
        _phase2_kernel,
        out_shape=jax.ShapeDtypeStruct((b, plane, n_pad), odt),
        grid=(b, n_tiles),
        in_specs=[
            pl.BlockSpec((1, plane, tn), lambda i, n: (i, 0, n)),
            pl.BlockSpec((1, plane, plane), lambda i, n: (i, 0, 0)),
            pl.BlockSpec((1, plane, 1), lambda i, n: (i, 0, 0)),
            pl.BlockSpec(memory_space=pltpu.MemorySpace.SMEM),
        ],
        out_specs=pl.BlockSpec((1, plane, tn), lambda i, n: (i, 0, n)),
        compiler_params=pltpu.CompilerParams(
            dimension_semantics=("parallel", "parallel"),
            vmem_limit_bytes=48 << 20),
    )(x, weff, bfull, gamma)

    if n_pad != N:
        out = out[:, :, :N]
    return out.reshape(b, plane, h, w)


# ----------------------- pure-JAX reference & params -------------------------- #
def spatial_gcn_reference(x_nchw, p):
    """Pure-JAX reference mirroring the PyTorch forward (eval-mode BN)."""
    b, plane, h, w = x_nchw.shape
    c = plane // 2
    N = h * w
    eps = 1e-5

    def conv1x1(x, W, bias=None):
        y = jnp.einsum('bihw,oi->bohw', x, W)
        if bias is not None:
            y = y + bias[None, :, None, None]
        return y

    node_k = conv1x1(x_nchw, p['wk'], p['bk']).reshape(b, c, N).transpose(0, 2, 1)
    node_v = conv1x1(x_nchw, p['wv'], p['bv']).reshape(b, c, N).transpose(0, 2, 1)
    node_q = conv1x1(x_nchw, p['wq'], p['bq']).reshape(b, c, N)

    AV = jnp.einsum('bcn,bnd->bcd', node_q, node_v)
    AV = jax.nn.softmax(AV, axis=2)
    AV = jnp.einsum('bnc,bcd->bnd', node_k, AV)
    AV = AV.transpose(0, 2, 1)                                  # (b, c, N)

    AVW = jnp.einsum('oi,bin->bon', p['wwg'], AV)
    AVW = ((AVW - p['wg_mean'][None, :, None])
           / jnp.sqrt(p['wg_var'][None, :, None] + eps)
           * p['wg_w'][None, :, None] + p['wg_b'][None, :, None])
    AVW = AVW.reshape(b, c, h, w)

    y = conv1x1(AVW, p['wout'], p['bout'])
    y = ((y - p['abn_mean'][None, :, None, None])
         / jnp.sqrt(p['abn_var'][None, :, None, None] + eps)
         * p['abn_w'][None, :, None, None] + p['abn_b'][None, :, None, None])
    y = jnp.where(y > 0, y, 0.01 * y)
    return p['gamma'][0] * y + x_nchw


def make_params(key, plane):
    c = plane // 2
    ks = jax.random.split(key, 16)
    u = lambda k, shape, s=0.2: jax.random.uniform(k, shape, jnp.float32, -s, s)
    return {
        'wk': u(ks[0], (c, plane)), 'bk': u(ks[1], (c,)),
        'wv': u(ks[2], (c, plane)), 'bv': u(ks[3], (c,)),
        'wq': u(ks[4], (c, plane)), 'bq': u(ks[5], (c,)),
        'wwg': u(ks[6], (c, c)),
        'wg_w': 1.0 + u(ks[7], (c,)), 'wg_b': u(ks[8], (c,)),
        'wg_mean': u(ks[9], (c,)), 'wg_var': 0.5 + jnp.abs(u(ks[10], (c,))),
        'wout': u(ks[11], (plane, c)), 'bout': u(ks[12], (plane,)),
        'abn_w': 1.0 + u(ks[13], (plane,)), 'abn_b': u(ks[14], (plane,)),
        'abn_mean': jnp.zeros((plane,), jnp.float32),
        'abn_var': jnp.ones((plane,), jnp.float32),
        'gamma': jnp.array([0.5], jnp.float32),   # nonzero so the GCN branch is exercised
    }


if __name__ == "__main__":
    key = jax.random.PRNGKey(0)
    kx, kp, kx2, kp2, kx3, kp3 = jax.random.split(key, 6)

    # --- small shape, f32 compute, auto (fused single-pass) path ---
    b, plane, h, w = 2, 16, 16, 16
    x = jax.random.normal(kx, (b, plane, h, w), jnp.float32)
    params = make_params(kp, plane)
    out = jax.block_until_ready(
        spatial_gcn_pallas(x, params, compute_dtype=jnp.float32))
    ref = spatial_gcn_reference(x, params)
    assert out.shape == ref.shape == (b, plane, h, w)
    assert jnp.allclose(out, ref, atol=1e-3, rtol=1e-3), \
        f"f32 fused: max abs diff {jnp.max(jnp.abs(out - ref))}"

    # --- forced two-phase fallback: multi-tile N reduction (4 tiles of 256) ---
    b2, plane2, h2, w2 = 2, 64, 32, 32
    x2 = jax.random.normal(kx2, (b2, plane2, h2, w2), jnp.float32)
    params2 = make_params(kp2, plane2)
    out2 = jax.block_until_ready(
        spatial_gcn_pallas(x2, params2, compute_dtype=jnp.float32,
                           tn_target=256, fuse=False))
    ref2 = spatial_gcn_reference(x2, params2)
    assert jnp.allclose(out2, ref2, atol=1e-3, rtol=1e-3), \
        f"f32 two-phase: max abs diff {jnp.max(jnp.abs(out2 - ref2))}"

    # --- ragged N (18*18 = 324): padded-to-128 tiling on the two-phase path ---
    b3, plane3, h3, w3 = 2, 16, 18, 18
    x3 = jax.random.normal(kx3, (b3, plane3, h3, w3), jnp.float32)
    params3 = make_params(kp3, plane3)
    out3 = jax.block_until_ready(
        spatial_gcn_pallas(x3, params3, compute_dtype=jnp.float32,
                           tn_target=128, fuse=False))
    ref3 = spatial_gcn_reference(x3, params3)
    assert jnp.allclose(out3, ref3, atol=1e-3, rtol=1e-3), \
        f"f32 ragged: max abs diff {jnp.max(jnp.abs(out3 - ref3))}"

    # --- default path: bf16 x / compute (f32 accumulation & softmax), f32 out --
    # NOTE: the residual (gamma*y + x) uses bf16-quantized x -> loose tolerance.
    out_bf16 = jax.block_until_ready(spatial_gcn_pallas(x, params))
    assert jnp.allclose(out_bf16, ref, atol=5e-2, rtol=5e-2), \
        f"bf16: max abs diff {jnp.max(jnp.abs(out_bf16 - ref))}"

    # --- bf16 storage for the output too (halves phase-2 write traffic) ---
    out_bf16o = jax.block_until_ready(
        spatial_gcn_pallas(x, params, out_dtype=jnp.bfloat16))
    assert out_bf16o.dtype == jnp.bfloat16
    assert jnp.allclose(out_bf16o.astype(jnp.float32), ref, atol=1e-1, rtol=1e-1)

    print("KERNEL_OK")
</pallas_src>

<mosaic_0001>
module attributes {stable_mosaic.version = 11 : i64} {
  func.func @_fused_kernel(%arg0: i32, %arg1: memref<1x16x256xf32, #tpu.memory_space<vmem>>, %arg2: memref<8x16xf32, #tpu.memory_space<vmem>>, %arg3: memref<16x8xf32, #tpu.memory_space<vmem>>, %arg4: memref<8x1xf32, #tpu.memory_space<vmem>>, %arg5: memref<1x8xf32, #tpu.memory_space<vmem>>, %arg6: memref<8x8xf32, #tpu.memory_space<vmem>>, %arg7: memref<8x16xf32, #tpu.memory_space<vmem>>, %arg8: memref<8x16xf32, #tpu.memory_space<vmem>>, %arg9: memref<8x1xf32, #tpu.memory_space<vmem>>, %arg10: memref<16x1xf32, #tpu.memory_space<vmem>>, %arg11: memref<1xf32, #tpu.memory_space<smem>>, %arg12: memref<1x16x256xf32, #tpu.memory_space<vmem>>) attributes {dimension_semantics = [#tpu.dimension_semantics<parallel>], iteration_bounds = array<i64: 2>, scalar_prefetch = 0 : i64, scratch_operands = 0 : i64, tpu.core_type = #tpu.core_type<tc>, window_params = [{transform_indices = @transform_0, window_bounds = array<i64: 1, 16, 256>}, {pipeline_mode = #tpu.pipeline_mode<synchronous>, transform_indices = @transform_1, window_bounds = array<i64: 8, 16>}, {pipeline_mode = #tpu.pipeline_mode<synchronous>, transform_indices = @transform_2, window_bounds = array<i64: 16, 8>}, {pipeline_mode = #tpu.pipeline_mode<synchronous>, transform_indices = @transform_3, window_bounds = array<i64: 8, 1>}, {pipeline_mode = #tpu.pipeline_mode<synchronous>, transform_indices = @transform_4, window_bounds = array<i64: 1, 8>}, {pipeline_mode = #tpu.pipeline_mode<synchronous>, transform_indices = @transform_5, window_bounds = array<i64: 8, 8>}, {pipeline_mode = #tpu.pipeline_mode<synchronous>, transform_indices = @transform_6, window_bounds = array<i64: 8, 16>}, {pipeline_mode = #tpu.pipeline_mode<synchronous>, transform_indices = @transform_7, window_bounds = array<i64: 8, 16>}, {pipeline_mode = #tpu.pipeline_mode<synchronous>, transform_indices = @transform_8, window_bounds = array<i64: 8, 1>}, {pipeline_mode = #tpu.pipeline_mode<synchronous>, transform_indices = @transform_9, window_bounds = array<i64: 16, 1>}, {transform_indices = @transform_10, window_bounds = array<i64: 1>}, {transform_indices = @transform_11, window_bounds = array<i64: 1, 16, 256>}]} {
    %c0 = arith.constant 0 : index
    %c0_0 = arith.constant 0 : index
    %c0_1 = arith.constant 0 : index
    %0 = vector.load %arg1[%c0, %c0_0, %c0_1] : memref<1x16x256xf32, #tpu.memory_space<vmem>>, vector<1x16x256xf32>
    %1 = vector.shape_cast %0 : vector<1x16x256xf32> to vector<16x256xf32>
    %cst = arith.constant dense<0.000000e+00> : vector<16x16xf32>
    %2 = tpu.matmul %1, %1, %cst {dimension_numbers = #tpu.dot_dimension_numbers<[1], [1], [0], [0], [0, 0, 1, 0], [], []>} : vector<16x256xf32>, vector<16x256xf32>, vector<16x16xf32> -> vector<16x16xf32>
    %cst_2 = arith.constant dense<0.000000e+00> : vector<16xf32>
    %3 = vector.multi_reduction <add>, %1, %cst_2 [1] : vector<16x256xf32> to vector<16xf32>
    %4 = vector.shape_cast %3 : vector<16xf32> to vector<16x1xf32>
    %c0_3 = arith.constant 0 : index
    %c0_4 = arith.constant 0 : index
    %5 = vector.load %arg2[%c0_3, %c0_4] : memref<8x16xf32, #tpu.memory_space<vmem>>, vector<8x16xf32>
    %c0_5 = arith.constant 0 : index
    %c0_6 = arith.constant 0 : index
    %6 = vector.load %arg3[%c0_5, %c0_6] : memref<16x8xf32, #tpu.memory_space<vmem>>, vector<16x8xf32>
    %c0_7 = arith.constant 0 : index
    %c0_8 = arith.constant 0 : index
    %7 = vector.load %arg4[%c0_7, %c0_8] : memref<8x1xf32, #tpu.memory_space<vmem>>, vector<8x1xf32>
    %c0_9 = arith.constant 0 : index
    %c0_10 = arith.constant 0 : index
    %8 = vector.load %arg5[%c0_9, %c0_10] : memref<1x8xf32, #tpu.memory_space<vmem>>, vector<1x8xf32>
    %c0_11 = arith.constant 0 : index
    %c0_12 = arith.constant 0 : index
    %9 = vector.load %arg6[%c0_11, %c0_12] : memref<8x8xf32, #tpu.memory_space<vmem>>, vector<8x8xf32>
    %c0_13 = arith.constant 0 : index
    %c0_14 = arith.constant 0 : index
    %10 = vector.load %arg7[%c0_13, %c0_14] : memref<8x16xf32, #tpu.memory_space<vmem>>, vector<8x16xf32>
    %c0_15 = arith.constant 0 : index
    %c0_16 = arith.constant 0 : index
    %11 = vector.load %arg8[%c0_15, %c0_16] : memref<8x16xf32, #tpu.memory_space<vmem>>, vector<8x16xf32>
    %c0_17 = arith.constant 0 : index
    %c0_18 = arith.constant 0 : index
    %12 = vector.load %arg9[%c0_17, %c0_18] : memref<8x1xf32, #tpu.memory_space<vmem>>, vector<8x1xf32>
    %c0_19 = arith.constant 0 : index
    %c0_20 = arith.constant 0 : index
    %13 = vector.load %arg10[%c0_19, %c0_20] : memref<16x1xf32, #tpu.memory_space<vmem>>, vector<16x1xf32>
    %cst_21 = arith.constant dense<0.000000e+00> : vector<8x16xf32>
    %14 = tpu.matmul %5, %2, %cst_21 {dimension_numbers = #tpu.dot_dimension_numbers<[1], [0], [0], [1], [0, 0, 1, 1], [], []>} : vector<8x16xf32>, vector<16x16xf32>, vector<8x16xf32> -> vector<8x16xf32>
    %cst_22 = arith.constant dense<0.000000e+00> : vector<8x8xf32>
    %15 = tpu.matmul %14, %6, %cst_22 {dimension_numbers = #tpu.dot_dimension_numbers<[1], [0], [0], [1], [0, 0, 1, 1], [], []>} : vector<8x16xf32>, vector<16x8xf32>, vector<8x8xf32> -> vector<8x8xf32>
    %cst_23 = arith.constant dense<0.000000e+00> : vector<8x1xf32>
    %16 = tpu.matmul %5, %4, %cst_23 {dimension_numbers = #tpu.dot_dimension_numbers<[1], [0], [0], [1], [0, 0, 1, 1], [], []>} : vector<8x16xf32>, vector<16x1xf32>, vector<8x1xf32> -> vector<8x1xf32>
    %cst_24 = arith.constant dense<0.000000e+00> : vector<1x8xf32>
    %17 = tpu.matmul %4, %6, %cst_24 {dimension_numbers = #tpu.dot_dimension_numbers<[0], [0], [1], [1], [0, 1, 1, 1], [], []>} : vector<16x1xf32>, vector<16x8xf32>, vector<1x8xf32> -> vector<1x8xf32>
    %18 = vector.broadcast %16 : vector<8x1xf32> to vector<8x8xf32>
    %19 = vector.broadcast %8 : vector<1x8xf32> to vector<8x8xf32>
    %20 = arith.mulf %18, %19 : vector<8x8xf32>
    %21 = arith.addf %15, %20 : vector<8x8xf32>
    %22 = vector.broadcast %7 : vector<8x1xf32> to vector<8x8xf32>
    %23 = vector.broadcast %17 : vector<1x8xf32> to vector<8x8xf32>
    %24 = arith.mulf %22, %23 : vector<8x8xf32>
    %25 = arith.addf %21, %24 : vector<8x8xf32>
    %26 = arith.addf %25, %9 : vector<8x8xf32>
    %cst_25 = arith.constant dense<0xFF800000> : vector<8xf32>
    %27 = vector.multi_reduction <maximumf>, %26, %cst_25 [1] : vector<8x8xf32> to vector<8xf32>
    %28 = vector.shape_cast %27 : vector<8xf32> to vector<8x1xf32>
    %29 = vector.broadcast %28 : vector<8x1xf32> to vector<8x8xf32>
    %30 = arith.subf %26, %29 : vector<8x8xf32>
    %31 = math.exp %30 : vector<8x8xf32>
    %cst_26 = arith.constant dense<0.000000e+00> : vector<8xf32>
    %32 = vector.multi_reduction <add>, %31, %cst_26 [1] : vector<8x8xf32> to vector<8xf32>
    %33 = vector.shape_cast %32 : vector<8xf32> to vector<8x1xf32>
    %34 = tpu.reciprocal %33 : vector<8x1xf32> -> vector<8x1xf32>
    %35 = vector.broadcast %34 : vector<8x1xf32> to vector<8x8xf32>
    %36 = arith.mulf %31, %35 : vector<8x8xf32>
    %cst_27 = arith.constant dense<0.000000e+00> : vector<8x16xf32>
    %37 = tpu.matmul %36, %11, %cst_27 {dimension_numbers = #tpu.dot_dimension_numbers<[1], [0], [0], [1], [0, 0, 1, 1], [], []>} : vector<8x8xf32>, vector<8x16xf32>, vector<8x16xf32> -> vector<8x16xf32>
    %cst_28 = arith.constant dense<0.000000e+00> : vector<16x16xf32>
    %38 = tpu.matmul %37, %10, %cst_28 {dimension_numbers = #tpu.dot_dimension_numbers<[0], [0], [1], [1], [0, 1, 1, 1], [], []>} : vector<8x16xf32>, vector<8x16xf32>, vector<16x16xf32> -> vector<16x16xf32>
    %cst_29 = arith.constant dense<0.000000e+00> : vector<16x1xf32>
    %39 = tpu.matmul %37, %12, %cst_29 {dimension_numbers = #tpu.dot_dimension_numbers<[0], [0], [1], [1], [0, 1, 1, 1], [], []>} : vector<8x16xf32>, vector<8x1xf32>, vector<16x1xf32> -> vector<16x1xf32>
    %40 = arith.addf %39, %13 : vector<16x1xf32>
    %cst_30 = arith.constant dense<0.000000e+00> : vector<16x256xf32>
    %41 = tpu.matmul %38, %1, %cst_30 {dimension_numbers = #tpu.dot_dimension_numbers<[1], [0], [0], [1], [0, 0, 1, 1], [], []>} : vector<16x16xf32>, vector<16x256xf32>, vector<16x256xf32> -> vector<16x256xf32>
    %42 = vector.broadcast %40 : vector<16x1xf32> to vector<16x256xf32>
    %43 = arith.addf %41, %42 : vector<16x256xf32>
    %cst_31 = arith.constant 0.000000e+00 : f32
    %44 = vector.broadcast %cst_31 : f32 to vector<16x256xf32>
    %45 = arith.cmpf ogt, %43, %44 : vector<16x256xf32>
    %cst_32 = arith.constant 0.00999999977 : f32
    %46 = vector.broadcast %cst_32 : f32 to vector<16x256xf32>
    %47 = arith.mulf %46, %43 : vector<16x256xf32>
    %48 = arith.select %45, %43, %47 : vector<16x256xi1>, vector<16x256xf32>
    %c0_33 = arith.constant 0 : index
    %49 = memref.load %arg11[%c0_33] : memref<1xf32, #tpu.memory_space<smem>>
    %50 = vector.broadcast %49 : f32 to vector<16x256xf32>
    %51 = arith.mulf %50, %48 : vector<16x256xf32>
    %52 = arith.addf %51, %1 : vector<16x256xf32>
    %c0_34 = arith.constant 0 : index
    %c0_35 = arith.constant 0 : index
    %c0_36 = arith.constant 0 : index
    %53 = vector.load %arg12[%c0_34, %c0_35, %c0_36] : memref<1x16x256xf32, #tpu.memory_space<vmem>>, vector<1x16x256xf32>
    %54 = vector.shape_cast %53 : vector<1x16x256xf32> to vector<16x256xf32>
    %55 = vector.shape_cast %52 : vector<16x256xf32> to vector<1x16x256xf32>
    tpu.vector_store %arg12[%c0_34, %c0_35, %c0_36], %55 {strides = array<i32>} : memref<1x16x256xf32, #tpu.memory_space<vmem>>, vector<1x16x256xf32>,
    return
  }
  func.func @transform_0(%arg0: i32) -> (i32, i32, i32) {
    %c0_i32 = arith.constant 0 : i32
    %c0_i32_0 = arith.constant 0 : i32
    %c0_i32_1 = arith.constant 0 : i32
    return %arg0, %c0_i32, %c0_i32_0 : i32, i32, i32
  }
  func.func @transform_1(%arg0: i32) -> (i32, i32) {
    %c0_i32 = arith.constant 0 : i32
    %c0_i32_0 = arith.constant 0 : i32
    %c0_i32_1 = arith.constant 0 : i32
    return %c0_i32, %c0_i32_0 : i32, i32
  }
  func.func @transform_2(%arg0: i32) -> (i32, i32) {
    %c0_i32 = arith.constant 0 : i32
    %c0_i32_0 = arith.constant 0 : i32
    %c0_i32_1 = arith.constant 0 : i32
    return %c0_i32, %c0_i32_0 : i32, i32
  }
  func.func @transform_3(%arg0: i32) -> (i32, i32) {
    %c0_i32 = arith.constant 0 : i32
    %c0_i32_0 = arith.constant 0 : i32
    %c0_i32_1 = arith.constant 0 : i32
    return %c0_i32, %c0_i32_0 : i32, i32
  }
  func.func @transform_4(%arg0: i32) -> (i32, i32) {
    %c0_i32 = arith.constant 0 : i32
    %c0_i32_0 = arith.constant 0 : i32
    %c0_i32_1 = arith.constant 0 : i32
    return %c0_i32, %c0_i32_0 : i32, i32
  }
  func.func @transform_5(%arg0: i32) -> (i32, i32) {
    %c0_i32 = arith.constant 0 : i32
    %c0_i32_0 = arith.constant 0 : i32
    %c0_i32_1 = arith.constant 0 : i32
    return %c0_i32, %c0_i32_0 : i32, i32
  }
  func.func @transform_6(%arg0: i32) -> (i32, i32) {
    %c0_i32 = arith.constant 0 : i32
    %c0_i32_0 = arith.constant 0 : i32
    %c0_i32_1 = arith.constant 0 : i32
    return %c0_i32, %c0_i32_0 : i32, i32
  }
  func.func @transform_7(%arg0: i32) -> (i32, i32) {
    %c0_i32 = arith.constant 0 : i32
    %c0_i32_0 = arith.constant 0 : i32
    %c0_i32_1 = arith.constant 0 : i32
    return %c0_i32, %c0_i32_0 : i32, i32
  }
  func.func @transform_8(%arg0: i32) -> (i32, i32) {
    %c0_i32 = arith.constant 0 : i32
    %c0_i32_0 = arith.constant 0 : i32
    %c0_i32_1 = arith.constant 0 : i32
    return %c0_i32, %c0_i32_0 : i32, i32
  }
  func.func @transform_9(%arg0: i32) -> (i32, i32) {
    %c0_i32 = arith.constant 0 : i32
    %c0_i32_0 = arith.constant 0 : i32
    %c0_i32_1 = arith.constant 0 : i32
    return %c0_i32, %c0_i32_0 : i32, i32
  }
  func.func @transform_10(%arg0: i32) -> i32 {
    %c0_i32 = arith.constant 0 : i32
    %c0_i32_0 = arith.constant 0 : i32
    return %c0_i32 : i32
  }
  func.func @transform_11(%arg0: i32) -> (i32, i32, i32) {
    %c0_i32 = arith.constant 0 : i32
    %c0_i32_0 = arith.constant 0 : i32
    %c0_i32_1 = arith.constant 0 : i32
    return %arg0, %c0_i32, %c0_i32_0 : i32, i32, i32
  }
}

</mosaic_0001>

<llo_original>
// kernel: spatial_gcn_pallas.1
$region0: #{spatial_gcn_pallas.1}
  #allocation0 [shape = 'u32[]', space=smem, size = 0x4, offset = 0x4, fixed_abs, tag = 'smem constant byte address 0x4 - core index']
  #allocation1 [shape = 'u32[144,128]{1,0:T(1,128)}', space=vmem, size = 0x12000, scoped, tag = 'internal scratch']
  #allocation2 [shape = 'f32[1]{0:T(128)S(6)}', space=smem, size = 0x200, scoped, tag = 'scoped memory for spatial_gcn_pallas.1']
  %s0 = inlined_call_operand.vmem [shape: f32[2,16,256], index: 0, kind: input, shape index: {}]
  %s1 = inlined_call_operand.vmem [shape: f32[8,16], index: 1, kind: input, shape index: {}]
  %s2 = inlined_call_operand.vmem [shape: f32[16,8], index: 2, kind: input, shape index: {}]
  %s3 = inlined_call_operand.vmem [shape: f32[8,1], index: 3, kind: input, shape index: {}]
  %s4 = inlined_call_operand.vmem [shape: f32[1,8], index: 4, kind: input, shape index: {}]
  %s5 = inlined_call_operand.vmem [shape: f32[8,8], index: 5, kind: input, shape index: {}]
  %s6 = inlined_call_operand.vmem [shape: f32[8,16], index: 6, kind: input, shape index: {}]
  %s7 = inlined_call_operand.vmem [shape: f32[8,16], index: 7, kind: input, shape index: {}]
  %s8 = inlined_call_operand.vmem [shape: f32[8,1], index: 8, kind: input, shape index: {}]
  %s9 = inlined_call_operand.vmem [shape: f32[16,1], index: 9, kind: input, shape index: {}]
  %s10 = inlined_call_operand.<no memory space> [shape: f32[1], index: 10, kind: input, shape index: {}]
  %s11 = inlined_call_operand.vmem [shape: f32[2,16,256], index: 11, kind: output, shape index: {}]
  %s12 = sld [smem:[#allocation0]]
  $region77: #{spatial_gcn_pallas.1} parent=0
    _
  %s14 = ssub.s32 1, %s12
  %s15 = scalar_select 0, %s14, %s12
  %16 = sst [smem:[#allocation2]] %s10
  loop: start=0, step=1, limit=4
  $region2: #{spatial_gcn_pallas.1} parent=0 // loop_pre_header
    _
  $region3: #{spatial_gcn_pallas.1} parent=0 // loop_header
    %s18 = sphi 0, %s22
    %p19 = scmp.ge.s32.totalorder %s18, 4
    %s28 = sphi 0, %s30
    %s31 = sphi 0, %s28
    %s32 = sphi 0, %s31
    %s48 = sphi 0, %s32
    %s52 = sphi 0, %s52
    %s54 = sphi 0, %s52
    %s55 = sphi 0, %s54
    %s69 = sphi 0, %s55
    %s73 = sphi 0, %s73
    %s75 = sphi 0, %s73
    %s76 = sphi 0, %s75
    %s90 = sphi 0, %s76
    %s94 = sphi 0, %s94
    %s96 = sphi 0, %s94
    %s97 = sphi 0, %s96
    %s111 = sphi 0, %s97
    %s115 = sphi 0, %s115
    %s117 = sphi 0, %s115
    %s118 = sphi 0, %s117
    %s132 = sphi 0, %s118
    %s136 = sphi 0, %s136
    %s138 = sphi 0, %s136
    %s139 = sphi 0, %s138
    %s153 = sphi 0, %s139
    %s157 = sphi 0, %s157
    %s159 = sphi 0, %s157
    %s160 = sphi 0, %s159
    %s174 = sphi 0, %s160
    %s178 = sphi 0, %s178
    %s180 = sphi 0, %s178
    %s181 = sphi 0, %s180
    %s195 = sphi 0, %s181
    %s199 = sphi 0, %s199
    %s201 = sphi 0, %s199
    %s202 = sphi 0, %s201
    %s216 = sphi 0, %s202
    %s220 = sphi 0, %s220
    %s222 = sphi 0, %s220
    %s223 = sphi 0, %s222
    %s237 = sphi 0, %s223
    %s241 = sphi 0, %s241
    %s243 = sphi 0, %s241
    %s244 = sphi 0, %s243
    %s258 = sphi 0, %s244
    %s264 = sphi 0, %s266
    %s267 = sphi 0, %s264
    %s268 = sphi 0, %s267
    %s284 = sphi 0, %s268
  $region4: #{spatial_gcn_pallas.1} parent=0 // loop_header_branch
    %21 = sbr.rel (%p19) target = $region8
  $region5: #{spatial_gcn_pallas.1} parent=0 // loop_body
    %s23 = ssub.s32 %s18, 1
    %s24 = ssub.s32 %s18, 2
    %s25 = sadd.s32 %s18, 1
    %s26 = ssub.s32 %s18, %s25
    %p27 = scmp.eq.s32.totalorder %s26, 0
    %s29 = sadd.s32 %s28, 1
    %s30 = scalar_select %p27, %s28, %s29
    %p33 = pneg %p27
    %p34 = scmp.eq.s32.totalorder %s18, 1
    %p35 = por %p33, %p34
    %p36 = scmp.ne.s32.totalorder %s28, %s31
    %p37 = scmp.eq.s32.totalorder %s18, 0
    %p38 = por %p36, %p37
    %p39 = scmp.ne.s32.totalorder %s28, %s31
    %p40 = scmp.eq.s32.totalorder %s23, 1
    %p41 = por %p39, %p40
    %p42 = scmp.ne.s32.totalorder %s31, %s32
    %p43 = scmp.eq.s32.totalorder %s23, 0
    %p44 = por %p42, %p43
    %p45 = scmp.ne.s32.totalorder %s31, %s32
    %p46 = scmp.eq.s32.totalorder %s24, 1
    %p47 = por %p45, %p46
    %p49 = scmp.ne.s32.totalorder %s32, %s48
    %p50 = scmp.eq.s32.totalorder %s24, 0
    %p51 = por %p49, %p50
    %s53 = sadd.s32 %s52, 1
    %p56 = scmp.eq.s32.totalorder %s18, 1
    %p57 = scmp.ne.s32.totalorder %s52, %s54
    %p58 = scmp.eq.s32.totalorder %s18, 0
    %p59 = por %p57, %p58
    %p60 = scmp.ne.s32.totalorder %s52, %s54
    %p61 = scmp.eq.s32.totalorder %s23, 1
    %p62 = por %p60, %p61
    %p63 = scmp.ne.s32.totalorder %s54, %s55
    %p64 = scmp.eq.s32.totalorder %s23, 0
    %p65 = por %p63, %p64
    %p66 = scmp.ne.s32.totalorder %s54, %s55
    %p67 = scmp.eq.s32.totalorder %s24, 1
    %p68 = por %p66, %p67
    %p70 = scmp.ne.s32.totalorder %s55, %s69
    %p71 = scmp.eq.s32.totalorder %s24, 0
    %p72 = por %p70, %p71
    %s74 = sadd.s32 %s73, 1
    %p77 = scmp.eq.s32.totalorder %s18, 1
    %p78 = scmp.ne.s32.totalorder %s73, %s75
    %p79 = scmp.eq.s32.totalorder %s18, 0
    %p80 = por %p78, %p79
    %p81 = scmp.ne.s32.totalorder %s73, %s75
    %p82 = scmp.eq.s32.totalorder %s23, 1
    %p83 = por %p81, %p82
    %p84 = scmp.ne.s32.totalorder %s75, %s76
    %p85 = scmp.eq.s32.totalorder %s23, 0
    %p86 = por %p84, %p85
    %p87 = scmp.ne.s32.totalorder %s75, %s76
    %p88 = scmp.eq.s32.totalorder %s24, 1
    %p89 = por %p87, %p88
    %p91 = scmp.ne.s32.totalorder %s76, %s90
    %p92 = scmp.eq.s32.totalorder %s24, 0
    %p93 = por %p91, %p92
    %s95 = sadd.s32 %s94, 1
    %p98 = scmp.eq.s32.totalorder %s18, 1
    %p99 = scmp.ne.s32.totalorder %s94, %s96
    %p100 = scmp.eq.s32.totalorder %s18, 0
    %p101 = por %p99, %p100
    %p102 = scmp.ne.s32.totalorder %s94, %s96
    %p103 = scmp.eq.s32.totalorder %s23, 1
    %p104 = por %p102, %p103
    %p105 = scmp.ne.s32.totalorder %s96, %s97
    %p106 = scmp.eq.s32.totalorder %s23, 0
    %p107 = por %p105, %p106
    %p108 = scmp.ne.s32.totalorder %s96, %s97
    %p109 = scmp.eq.s32.totalorder %s24, 1
    %p110 = por %p108, %p109
    %p112 = scmp.ne.s32.totalorder %s97, %s111
    %p113 = scmp.eq.s32.totalorder %s24, 0
    %p114 = por %p112, %p113
    %s116 = sadd.s32 %s115, 1
    %p119 = scmp.eq.s32.totalorder %s18, 1
    %p120 = scmp.ne.s32.totalorder %s115, %s117
    %p121 = scmp.eq.s32.totalorder %s18, 0
    %p122 = por %p120, %p121
    %p123 = scmp.ne.s32.totalorder %s115, %s117
    %p124 = scmp.eq.s32.totalorder %s23, 1
    %p125 = por %p123, %p124
    %p126 = scmp.ne.s32.totalorder %s117, %s118
    %p127 = scmp.eq.s32.totalorder %s23, 0
    %p128 = por %p126, %p127
    %p129 = scmp.ne.s32.totalorder %s117, %s118
    %p130 = scmp.eq.s32.totalorder %s24, 1
    %p131 = por %p129, %p130
    %p133 = scmp.ne.s32.totalorder %s118, %s132
    %p134 = scmp.eq.s32.totalorder %s24, 0
    %p135 = por %p133, %p134
    %s137 = sadd.s32 %s136, 1
    %p140 = scmp.eq.s32.totalorder %s18, 1
    %p141 = scmp.ne.s32.totalorder %s136, %s138
    %p142 = scmp.eq.s32.totalorder %s18, 0
    %p143 = por %p141, %p142
    %p144 = scmp.ne.s32.totalorder %s136, %s138
    %p145 = scmp.eq.s32.totalorder %s23, 1
    %p146 = por %p144, %p145
    %p147 = scmp.ne.s32.totalorder %s138, %s139
    %p148 = scmp.eq.s32.totalorder %s23, 0
    %p149 = por %p147, %p148
    %p150 = scmp.ne.s32.totalorder %s138, %s139
    %p151 = scmp.eq.s32.totalorder %s24, 1
    %p152 = por %p150, %p151
    %p154 = scmp.ne.s32.totalorder %s139, %s153
    %p155 = scmp.eq.s32.totalorder %s24, 0
    %p156 = por %p154, %p155
    %s158 = sadd.s32 %s157, 1
    %p161 = scmp.eq.s32.totalorder %s18, 1
    %p162 = scmp.ne.s32.totalorder %s157, %s159
    %p163 = scmp.eq.s32.totalorder %s18, 0
    %p164 = por %p162, %p163
    %p165 = scmp.ne.s32.totalorder %s157, %s159
    %p166 = scmp.eq.s32.totalorder %s23, 1
    %p167 = por %p165, %p166
    %p168 = scmp.ne.s32.totalorder %s159, %s160
    %p169 = scmp.eq.s32.totalorder %s23, 0
    %p170 = por %p168, %p169
    %p171 = scmp.ne.s32.totalorder %s159, %s160
    %p172 = scmp.eq.s32.totalorder %s24, 1
    %p173 = por %p171, %p172
    %p175 = scmp.ne.s32.totalorder %s160, %s174
    %p176 = scmp.eq.s32.totalorder %s24, 0
    %p177 = por %p175, %p176
    %s179 = sadd.s32 %s178, 1
    %p182 = scmp.eq.s32.totalorder %s18, 1
    %p183 = scmp.ne.s32.totalorder %s178, %s180
    %p184 = scmp.eq.s32.totalorder %s18, 0
    %p185 = por %p183, %p184
    %p186 = scmp.ne.s32.totalorder %s178, %s180
    %p187 = scmp.eq.s32.totalorder %s23, 1
    %p188 = por %p186, %p187
    %p189 = scmp.ne.s32.totalorder %s180, %s181
    %p190 = scmp.eq.s32.totalorder %s23, 0
    %p191 = por %p189, %p190
    %p192 = scmp.ne.s32.totalorder %s180, %s181
    %p193 = scmp.eq.s32.totalorder %s24, 1
    %p194 = por %p192, %p193
    %p196 = scmp.ne.s32.totalorder %s181, %s195
    %p197 = scmp.eq.s32.totalorder %s24, 0
    %p198 = por %p196, %p197
    %s200 = sadd.s32 %s199, 1
    %p203 = scmp.eq.s32.totalorder %s18, 1
    %p204 = scmp.ne.s32.totalorder %s199, %s201
    %p205 = scmp.eq.s32.totalorder %s18, 0
    %p206 = por %p204, %p205
    %p207 = scmp.ne.s32.totalorder %s199, %s201
    %p208 = scmp.eq.s32.totalorder %s23, 1
    %p209 = por %p207, %p208
    %p210 = scmp.ne.s32.totalorder %s201, %s202
    %p211 = scmp.eq.s32.totalorder %s23, 0
    %p212 = por %p210, %p211
    %p213 = scmp.ne.s32.totalorder %s201, %s202
    %p214 = scmp.eq.s32.totalorder %s24, 1
    %p215 = por %p213, %p214
    %p217 = scmp.ne.s32.totalorder %s202, %s216
    %p218 = scmp.eq.s32.totalorder %s24, 0
    %p219 = por %p217, %p218
    %s221 = sadd.s32 %s220, 1
    %p224 = scmp.eq.s32.totalorder %s18, 1
    %p225 = scmp.ne.s32.totalorder %s220, %s222
    %p226 = scmp.eq.s32.totalorder %s18, 0
    %p227 = por %p225, %p226
    %p228 = scmp.ne.s32.totalorder %s220, %s222
    %p229 = scmp.eq.s32.totalorder %s23, 1
    %p230 = por %p228, %p229
    %p231 = scmp.ne.s32.totalorder %s222, %s223
    %p232 = scmp.eq.s32.totalorder %s23, 0
    %p233 = por %p231, %p232
    %p234 = scmp.ne.s32.totalorder %s222, %s223
    %p235 = scmp.eq.s32.totalorder %s24, 1
    %p236 = por %p234, %p235
    %p238 = scmp.ne.s32.totalorder %s223, %s237
    %p239 = scmp.eq.s32.totalorder %s24, 0
    %p240 = por %p238, %p239
    %s242 = sadd.s32 %s241, 1
    %p245 = scmp.eq.s32.totalorder %s18, 1
    %p246 = scmp.ne.s32.totalorder %s241, %s243
    %p247 = scmp.eq.s32.totalorder %s18, 0
    %p248 = por %p246, %p247
    %p249 = scmp.ne.s32.totalorder %s241, %s243
    %p250 = scmp.eq.s32.totalorder %s23, 1
    %p251 = por %p249, %p250
    %p252 = scmp.ne.s32.totalorder %s243, %s244
    %p253 = scmp.eq.s32.totalorder %s23, 0
    %p254 = por %p252, %p253
    %p255 = scmp.ne.s32.totalorder %s243, %s244
    %p256 = scmp.eq.s32.totalorder %s24, 1
    %p257 = por %p255, %p256
    %p259 = scmp.ne.s32.totalorder %s244, %s258
    %p260 = scmp.eq.s32.totalorder %s24, 0
    %p261 = por %p259, %p260
    %s262 = ssub.s32 %s18, %s25
    %p263 = scmp.eq.s32.totalorder %s262, 0
    %s265 = sadd.s32 %s264, 1
    %s266 = scalar_select %p263, %s264, %s265
    %p269 = pneg %p263
    %p270 = scmp.eq.s32.totalorder %s18, 1
    %p271 = por %p269, %p270
    %p272 = scmp.ne.s32.totalorder %s264, %s267
    %p273 = scmp.eq.s32.totalorder %s18, 0
    %p274 = por %p272, %p273
    %p275 = scmp.ne.s32.totalorder %s264, %s267
    %p276 = scmp.eq.s32.totalorder %s23, 1
    %p277 = por %p275, %p276
    %p278 = scmp.ne.s32.totalorder %s267, %s268
    %p279 = scmp.eq.s32.totalorder %s23, 0
    %p280 = por %p278, %p279
    %p281 = scmp.ne.s32.totalorder %s267, %s268
    %p282 = scmp.eq.s32.totalorder %s24, 1
    %p283 = por %p281, %p282
    %p285 = scmp.ne.s32.totalorder %s268, %s284
    %p286 = scmp.eq.s32.totalorder %s24, 0
    %p287 = por %p285, %p286
    %p288 = scmp.le.s32.totalorder 1, %s18
    %p289 = scmp.lt.s32.totalorder %s18, 3
    %p290 = pnand %p288, %p289
    %p291 = pneg %p290
    // Predicated region
    $region9: #{spatial_gcn_pallas.1} parent=5 // pred_check
      _
    $region10: #{spatial_gcn_pallas.1} parent=5 // pred_check_branch
      %293 = sbr.rel (%p290) target = $region12
    $region11: #{spatial_gcn_pallas.1} parent=5 // pred_region
      %s294 = ssub.s32 %s18, 1
      // Predicated region
      $region13: #{spatial_gcn_pallas.1} parent=11 // pred_check
        %p295 = pneg %p65
      $region14: #{spatial_gcn_pallas.1} parent=11 // pred_check_branch
        %297 = sbr.rel (%p295) target = $region16
      $region15: #{spatial_gcn_pallas.1} parent=11 // pred_region
        _
      $region16: #{spatial_gcn_pallas.1} parent=11 // pred_fallthru
        _
      // Predicated region
      $region17: #{spatial_gcn_pallas.1} parent=11 // pred_check
        %p298 = pneg %p86
      $region18: #{spatial_gcn_pallas.1} parent=11 // pred_check_branch
        %300 = sbr.rel (%p298) target = $region20
      $region19: #{spatial_gcn_pallas.1} parent=11 // pred_region
        _
      $region20: #{spatial_gcn_pallas.1} parent=11 // pred_fallthru
        _
      // Predicated region
      $region21: #{spatial_gcn_pallas.1} parent=11 // pred_check
        %p301 = pneg %p107
      $region22: #{spatial_gcn_pallas.1} parent=11 // pred_check_branch
        %303 = sbr.rel (%p301) target = $region24
      $region23: #{spatial_gcn_pallas.1} parent=11 // pred_region
        _
      $region24: #{spatial_gcn_pallas.1} parent=11 // pred_fallthru
        _
      // Predicated region
      $region25: #{spatial_gcn_pallas.1} parent=11 // pred_check
        %p304 = pneg %p128
      $region26: #{spatial_gcn_pallas.1} parent=11 // pred_check_branch
        %306 = sbr.rel (%p304) target = $region28
      $region27: #{spatial_gcn_pallas.1} parent=11 // pred_region
        _
      $region28: #{spatial_gcn_pallas.1} parent=11 // pred_fallthru
        _
      // Predicated region
      $region29: #{spatial_gcn_pallas.1} parent=11 // pred_check
        %p307 = pneg %p149
      $region30: #{spatial_gcn_pallas.1} parent=11 // pred_check_branch
        %309 = sbr.rel (%p307) target = $region32
      $region31: #{spatial_gcn_pallas.1} parent=11 // pred_region
        _
      $region32: #{spatial_gcn_pallas.1} parent=11 // pred_fallthru
        _
      // Predicated region
      $region33: #{spatial_gcn_pallas.1} parent=11 // pred_check
        %p310 = pneg %p170
      $region34: #{spatial_gcn_pallas.1} parent=11 // pred_check_branch
        %312 = sbr.rel (%p310) target = $region36
      $region35: #{spatial_gcn_pallas.1} parent=11 // pred_region
        _
      $region36: #{spatial_gcn_pallas.1} parent=11 // pred_fallthru
        _
      // Predicated region
      $region37: #{spatial_gcn_pallas.1} parent=11 // pred_check
        %p313 = pneg %p191
      $region38: #{spatial_gcn_pallas.1} parent=11 // pred_check_branch
        %315 = sbr.rel (%p313) target = $region40
      $region39: #{spatial_gcn_pallas.1} parent=11 // pred_region
        _
      $region40: #{spatial_gcn_pallas.1} parent=11 // pred_fallthru
        _
      // Predicated region
      $region41: #{spatial_gcn_pallas.1} parent=11 // pred_check
        %p316 = pneg %p212
      $region42: #{spatial_gcn_pallas.1} parent=11 // pred_check_branch
        %318 = sbr.rel (%p316) target = $region44
      $region43: #{spatial_gcn_pallas.1} parent=11 // pred_region
        _
      $region44: #{spatial_gcn_pallas.1} parent=11 // pred_fallthru
        _
      // Predicated region
      $region45: #{spatial_gcn_pallas.1} parent=11 // pred_check
        %p319 = pneg %p233
      $region46: #{spatial_gcn_pallas.1} parent=11 // pred_check_branch
        %321 = sbr.rel (%p319) target = $region48
      $region47: #{spatial_gcn_pallas.1} parent=11 // pred_region
        _
      $region48: #{spatial_gcn_pallas.1} parent=11 // pred_fallthru
        _
      // Predicated region
      $region49: #{spatial_gcn_pallas.1} parent=11 // pred_check
        %p322 = pneg %p254
      $region50: #{spatial_gcn_pallas.1} parent=11 // pred_check_branch
        %324 = sbr.rel (%p322) target = $region52
      $region51: #{spatial_gcn_pallas.1} parent=11 // pred_region
        _
      $region52: #{spatial_gcn_pallas.1} parent=11 // pred_fallthru
        _
    $region12: #{spatial_gcn_pallas.1} parent=5 // pred_fallthru
      _
    %p325 = scmp.lt.s32.totalorder %s18, 2
    // Predicated region
    $region53: #{spatial_gcn_pallas.1} parent=5 // pred_check
      %p326 = pneg %p325
    $region54: #{spatial_gcn_pallas.1} parent=5 // pred_check_branch
      %328 = sbr.rel (%p326) target = $region56
    $region55: #{spatial_gcn_pallas.1} parent=5 // pred_region
      // Predicated region
      $region57: #{spatial_gcn_pallas.1} parent=55 // pred_check
        %p329 = pneg %p38
      $region58: #{spatial_gcn_pallas.1} parent=55 // pred_check_branch
        %331 = sbr.rel (%p329) target = $region60
      $region59: #{spatial_gcn_pallas.1} parent=55 // pred_region
        %p332 = scmp.lt.s32.totalorder %s18, 1
        %s333 = scalar_select %p332, %s18, 1
        %s334 = smul.addr %s333, 4
        %s335 = smul.addr %s334, 8
        %s336 = scalar_lea.vmem %s0, %s335
      $region60: #{spatial_gcn_pallas.1} parent=55 // pred_fallthru
        _
    $region56: #{spatial_gcn_pallas.1} parent=5 // pred_fallthru
      _
    %p337 = scmp.le.s32.totalorder 1, %s18
    %p338 = scmp.lt.s32.totalorder %s18, 3
    %p339 = pnand %p337, %p338
    %p340 = pneg %p339
    // Predicated region
    $region61: #{spatial_gcn_pallas.1} parent=5 // pred_check
      _
    $region62: #{spatial_gcn_pallas.1} parent=5 // pred_check_branch
      %342 = sbr.rel (%p339) target = $region64
    $region63: #{spatial_gcn_pallas.1} parent=5 // pred_region
      %s343 = ssub.s32 %s18, 1
      %p344 = scmp.lt.s32.totalorder %s23, 1
      %s345 = scalar_select %p344, %s23, 1
      %s346 = smul.addr %s345, 4
      %s347 = smul.addr %s346, 8
      %s348 = scalar_lea.vmem %s0, %s347
      %p349 = pneg %p44
      %p350 = pneg %p41
      %p351 = pneg %p65
      %p352 = pneg %p62
      %p353 = pneg %p86
      %p354 = pneg %p83
      %p355 = pneg %p107
      %p356 = pneg %p104
      %p357 = pneg %p128
      %p358 = pneg %p125
      %p359 = pneg %p149
      %p360 = pneg %p146
      %p361 = pneg %p170
      %p362 = pneg %p167
      %p363 = pneg %p191
      %p364 = pneg %p188
      %p365 = pneg %p212
      %p366 = pneg %p209
      %p367 = pneg %p233
      %p368 = pneg %p230
      %p369 = pneg %p254
      %p370 = pneg %p251
      %p371 = pneg %p280
      %p372 = pneg %p277
      %p373 = scmp.lt.s32.totalorder %s23, 1
      %s374 = scalar_select %p373, %s23, 1
      %s375 = smul.addr %s374, 4
      %s376 = smul.addr %s375, 8
      %s377 = scalar_lea.vmem %s11, %s376
      %p378 = scmp.lt.s32.totalorder %s23, 1
      %s379 = scalar_select %p378, %s23, 1
      %s380 = smul.addr %s379, 4
      %s381 = smul.addr %s380, 8
      %s382 = scalar_lea.vmem %s0, %s381
      %p383 = scmp.lt.s32.totalorder %s23, 1
      %s384 = scalar_select %p383, %s23, 1
      %s385 = smul.addr %s384, 4
      %s386 = smul.addr %s385, 8
      %s387 = scalar_lea.vmem %s11, %s386
      %v388 = vld [vmem:[%s382] sm:$0xff]
      %v389 = vld [vmem:[%s382 + $0x8] sm:$0xff]
      %v390 = vld [vmem:[%s382 + $0x10] sm:$0xff]
      %v391 = vld [vmem:[%s382 + $0x18] sm:$0xff]
      %392 = vmatprep.subr.mxu0 %v389
      %393 = vmatpush1.xpose.msra.mxu0 %v388
      %394 = vmatprep.subr.mxu0 %v391
      %395 = vmatpush1.xpose.msra.mxu0 %v390
      %396 = vmatprep.subr.mxu0 0.0
      %397 = vmatpush1.xpose.msra.mxu0 0.0
      %398 = vmatprep.subr.mxu0 0.0
      %399 = vmatpush1.xpose.msra.mxu0 0.0
      %400 = vmatprep.subr.mxu0 0.0
      %401 = vmatpush1.xpose.msra.mxu0 0.0
      %402 = vmatprep.subr.mxu0 0.0
      %403 = vmatpush1.xpose.msra.mxu0 0.0
      %404 = vmatprep.subr.mxu0 0.0
      %405 = vmatpush1.xpose.msra.mxu0 0.0
      %406 = vmatprep.subr.mxu0 0.0
      %407 = vmatpush1.xpose.msra.mxu0 0.0
      %408 = vmatprep.subr.mxu0 0.0
      %409 = vmatpush1.xpose.msra.mxu0 0.0
      %410 = vmatprep.subr.mxu0 0.0
      %411 = vmatpush1.xpose.msra.mxu0 0.0
      %412 = vmatprep.subr.mxu0 0.0
      %413 = vmatpush1.xpose.msra.mxu0 0.0
      %414 = vmatprep.subr.mxu0 0.0
      %415 = vmatpush1.xpose.msra.mxu0 0.0
      %416 = vmatprep.subr.mxu0 0.0
      %417 = vmatpush1.xpose.msra.mxu0 0.0
      %418 = vmatprep.subr.mxu0 0.0
      %419 = vmatpush1.xpose.msra.mxu0 0.0
      %420 = vmatprep.subr.mxu0 0.0
      %421 = vmatpush1.xpose.msra.mxu0 0.0
      %422 = vmatprep.subr.mxu0 0.0
      %423 = vmatpush1.xpose.msra.mxu0 0.0
      %424 = vmatprep.subr.mxu0 0.0
      %425 = vmatpush1.xpose.msra.mxu0 0.0
      %426 = vmatprep.subr.mxu0 0.0
      %427 = vmatpush1.xpose.msra.mxu0 0.0
      %428 = vmatprep.subr.mxu0 0.0
      %429 = vmatpush1.xpose.msra.mxu0 0.0
      %430 = vmatprep.subr.mxu0 0.0
      %431 = vmatpush1.xpose.msra.mxu0 0.0
      %432 = vmatprep.subr.mxu0 0.0
      %433 = vmatpush1.xpose.msra.mxu0 0.0
      %434 = vmatprep.subr.mxu0 0.0
      %435 = vmatpush1.xpose.msra.mxu0 0.0
      %436 = vmatprep.subr.mxu0 0.0
      %437 = vmatpush1.xpose.msra.mxu0 0.0
      %438 = vmatprep.subr.mxu0 0.0
      %439 = vmatpush1.xpose.msra.mxu0 0.0
      %440 = vmatprep.subr.mxu0 0.0
      %441 = vmatpush1.xpose.msra.mxu0 0.0
      %442 = vmatprep.subr.mxu0 0.0
      %443 = vmatpush1.xpose.msra.mxu0 0.0
      %444 = vmatprep.subr.mxu0 0.0
      %445 = vmatpush1.xpose.msra.mxu0 0.0
      %446 = vmatprep.subr.mxu0 0.0
      %447 = vmatpush1.xpose.msra.mxu0 0.0
      %448 = vmatprep.subr.mxu0 0.0
      %449 = vmatpush1.xpose.msra.mxu0 0.0
      %450 = vmatprep.subr.mxu0 0.0
      %451 = vmatpush1.xpose.msra.mxu0 0.0
      %452 = vmatprep.subr.mxu0 0.0
      %453 = vmatpush1.xpose.msra.mxu0 0.0
      %454 = vmatprep.subr.mxu0 0.0
      %455 = vmatpush1.xpose.msra.mxu0 0.0
      %456 = vmatprep.mubr.f32.mxu0 %v389
      %457 = vmatmul.mubr.f32.gmra.mrb[0].mxu0 %v388
      %v458 = vpop.f32.mrb[0].mxu0
      %v459 = vadd.f32 0.0, %v458
      %v460 = vpop.f32.mrb[0].mxu0
      %461 = vmatprep.mubr.f32.mxu0 %v391
      %462 = vmatmul.mubr.f32.gmra.mrb[0].mxu0 %v390
      %v463 = vpop.f32.mrb[0].mxu0
      %v464 = vadd.f32 0.0, %v463
      %v465 = vpop.f32.mrb[0].mxu0
      %466 = vdwg.mxu0
      %v467 = vadd.f32 %v388, %v389
      %468 = vadd.xlane.f32.xlu0 %v467
      %v469 = vpop.xlane.xlu0 %468
      %v470 = vadd.f32 %v390, %v391
      %471 = vadd.xlane.f32.xlu0 %v470
      %v472 = vpop.xlane.xlu0 %471
      %v473 = vld [vmem:[%s1] sm:$0xff]
      %v474 = vld [vmem:[%s2] sm:$0xff]
      %v475 = vld [vmem:[%s2 + $0x8] sm:$0xff]
      %v476 = vld [vmem:[%s3] sm:$0xff]
      %v477 = vld [vmem:[%s4] sm:$0x1]
      %v478 = vld [vmem:[%s5] sm:$0xff]
      %v479 = vld [vmem:[%s6] sm:$0xff]
      %v480 = vld [vmem:[%s7] sm:$0xff]
      %v481 = vld [vmem:[%s8] sm:$0xff]
      %v482 = vld [vmem:[%s9] sm:$0xff]
      %v483 = vld [vmem:[%s9 + $0x8] sm:$0xff]
      %vm484 = vcmask 130048
      %v486 = vsel %vm484, %v473, 0
      %488 = vmatprep.subr.mxu0 0.0
      %489 = vmatpush1.msra.mxu0 %v459
      %490 = vmatprep.subr.mxu0 0.0
      %491 = vmatpush1.msra.mxu0 %v464
      %492 = vmatprep.subr.mxu0 0.0
      %493 = vmatpush1.msra.mxu0 0.0
      %494 = vmatprep.subr.mxu0 0.0
      %495 = vmatpush1.msra.mxu0 0.0
      %496 = vmatprep.subr.mxu0 0.0
      %497 = vmatpush1.msra.mxu0 0.0
      %498 = vmatprep.subr.mxu0 0.0
      %499 = vmatpush1.msra.mxu0 0.0
      %500 = vmatprep.subr.mxu0 0.0
      %501 = vmatpush1.msra.mxu0 0.0
      %502 = vmatprep.subr.mxu0 0.0
      %503 = vmatpush1.msra.mxu0 0.0
      %504 = vmatprep.subr.mxu0 0.0
      %505 = vmatpush1.msra.mxu0 0.0
      %506 = vmatprep.subr.mxu0 0.0
      %507 = vmatpush1.msra.mxu0 0.0
      %508 = vmatprep.subr.mxu0 0.0
      %509 = vmatpush1.msra.mxu0 0.0
      %510 = vmatprep.subr.mxu0 0.0
      %511 = vmatpush1.msra.mxu0 0.0
      %512 = vmatprep.subr.mxu0 0.0
      %513 = vmatpush1.msra.mxu0 0.0
      %514 = vmatprep.subr.mxu0 0.0
      %515 = vmatpush1.msra.mxu0 0.0
      %516 = vmatprep.subr.mxu0 0.0
      %517 = vmatpush1.msra.mxu0 0.0
      %518 = vmatprep.subr.mxu0 0.0
      %519 = vmatpush1.msra.mxu0 0.0
      %520 = vmatprep.subr.mxu0 0.0
      %521 = vmatpush1.msra.mxu0 0.0
      %522 = vmatprep.subr.mxu0 0.0
      %523 = vmatpush1.msra.mxu0 0.0
      %524 = vmatprep.subr.mxu0 0.0
      %525 = vmatpush1.msra.mxu0 0.0
      %526 = vmatprep.subr.mxu0 0.0
      %527 = vmatpush1.msra.mxu0 0.0
      %528 = vmatprep.subr.mxu0 0.0
      %529 = vmatpush1.msra.mxu0 0.0
      %530 = vmatprep.subr.mxu0 0.0
      %531 = vmatpush1.msra.mxu0 0.0
      %532 = vmatprep.subr.mxu0 0.0
      %533 = vmatpush1.msra.mxu0 0.0
      %534 = vmatprep.subr.mxu0 0.0
      %535 = vmatpush1.msra.mxu0 0.0
      %536 = vmatprep.subr.mxu0 0.0
      %537 = vmatpush1.msra.mxu0 0.0
      %538 = vmatprep.subr.mxu0 0.0
      %539 = vmatpush1.msra.mxu0 0.0
      %540 = vmatprep.subr.mxu0 0.0
      %541 = vmatpush1.msra.mxu0 0.0
      %542 = vmatprep.subr.mxu0 0.0
      %543 = vmatpush1.msra.mxu0 0.0
      %544 = vmatprep.subr.mxu0 0.0
      %545 = vmatpush1.msra.mxu0 0.0
      %546 = vmatprep.subr.mxu0 0.0
      %547 = vmatpush1.msra.mxu0 0.0
      %548 = vmatprep.subr.mxu0 0.0
      %549 = vmatpush1.msra.mxu0 0.0
      %550 = vmatprep.subr.mxu0 0.0
      %551 = vmatpush1.msra.mxu0 0.0
      %552 = vmatprep.mubr.f32.mxu0 0.0
      %553 = vmatmul.mubr.f32.gmra.mrb[0].mxu0 %v486
      %v554 = vpop.f32.mrb[0].mxu0
      %v555 = vadd.f32 0.0, %v554
      %v556 = vpop.f32.mrb[0].mxu0
      %557 = vdwg.mxu0
      %558 = vmatprep.subr.mxu0 0.0
      %559 = vmatpush1.msra.mxu0 %v469
      %560 = vmatprep.subr.mxu0 0.0
      %561 = vmatpush1.msra.mxu0 %v472
      %562 = vmatprep.subr.mxu0 0.0
      %563 = vmatpush1.msra.mxu0 0.0
      %564 = vmatprep.subr.mxu0 0.0
      %565 = vmatpush1.msra.mxu0 0.0
      %566 = vmatprep.subr.mxu0 0.0
      %567 = vmatpush1.msra.mxu0 0.0
      %568 = vmatprep.subr.mxu0 0.0
      %569 = vmatpush1.msra.mxu0 0.0
      %570 = vmatprep.subr.mxu0 0.0
      %571 = vmatpush1.msra.mxu0 0.0
      %572 = vmatprep.subr.mxu0 0.0
      %573 = vmatpush1.msra.mxu0 0.0
      %574 = vmatprep.subr.mxu0 0.0
      %575 = vmatpush1.msra.mxu0 0.0
      %576 = vmatprep.subr.mxu0 0.0
      %577 = vmatpush1.msra.mxu0 0.0
      %578 = vmatprep.subr.mxu0 0.0
      %579 = vmatpush1.msra.mxu0 0.0
      %580 = vmatprep.subr.mxu0 0.0
      %581 = vmatpush1.msra.mxu0 0.0
      %582 = vmatprep.subr.mxu0 0.0
      %583 = vmatpush1.msra.mxu0 0.0
      %584 = vmatprep.subr.mxu0 0.0
      %585 = vmatpush1.msra.mxu0 0.0
      %586 = vmatprep.subr.mxu0 0.0
      %587 = vmatpush1.msra.mxu0 0.0
      %588 = vmatprep.subr.mxu0 0.0
      %589 = vmatpush1.msra.mxu0 0.0
      %590 = vmatprep.subr.mxu0 0.0
      %591 = vmatpush1.msra.mxu0 0.0
      %592 = vmatprep.subr.mxu0 0.0
      %593 = vmatpush1.msra.mxu0 0.0
      %594 = vmatprep.subr.mxu0 0.0
      %595 = vmatpush1.msra.mxu0 0.0
      %596 = vmatprep.subr.mxu0 0.0
      %597 = vmatpush1.msra.mxu0 0.0
      %598 = vmatprep.subr.mxu0 0.0
      %599 = vmatpush1.msra.mxu0 0.0
      %600 = vmatprep.subr.mxu0 0.0
      %601 = vmatpush1.msra.mxu0 0.0
      %602 = vmatprep.subr.mxu0 0.0
      %603 = vmatpush1.msra.mxu0 0.0
      %604 = vmatprep.subr.mxu0 0.0
      %605 = vmatpush1.msra.mxu0 0.0
      %606 = vmatprep.subr.mxu0 0.0
      %607 = vmatpush1.msra.mxu0 0.0
      %608 = vmatprep.subr.mxu0 0.0
      %609 = vmatpush1.msra.mxu0 0.0
      %610 = vmatprep.subr.mxu0 0.0
      %611 = vmatpush1.msra.mxu0 0.0
      %612 = vmatprep.subr.mxu0 0.0
      %613 = vmatpush1.msra.mxu0 0.0
      %614 = vmatprep.subr.mxu0 0.0
      %615 = vmatpush1.msra.mxu0 0.0
      %616 = vmatprep.subr.mxu0 0.0
      %617 = vmatpush1.msra.mxu0 0.0
      %618 = vmatprep.subr.mxu0 0.0
      %619 = vmatpush1.msra.mxu0 0.0
      %620 = vmatprep.subr.mxu0 0.0
      %621 = vmatpush1.msra.mxu0 0.0
      %622 = vmatprep.mubr.f32.mxu0 0.0
      %623 = vmatmul.mubr.f32.gmra.mrb[0].mxu0 %v486
      %v624 = vpop.f32.mrb[0].mxu0
      %v625 = vadd.f32 0.0, %v624
      %v626 = vpop.f32.mrb[0].mxu0
      %627 = vdwg.mxu0
      %628 = vxpose.xlu0.b32.start [1/16] %v469, 128
      %629 = vxpose.xlu0.b32.cont [2/16] %v472, 128
      %630 = vxpose.xlu0.b32.cont [3/16] 0.0, 128
      %631 = vxpose.xlu0.b32.cont [4/16] 0.0, 128
      %632 = vxpose.xlu0.b32.cont [5/16] 0.0, 128
      %633 = vxpose.xlu0.b32.cont [6/16] 0.0, 128
      %634 = vxpose.xlu0.b32.cont [7/16] 0.0, 128
      %635 = vxpose.xlu0.b32.cont [8/16] 0.0, 128
      %636 = vxpose.xlu0.b32.cont [9/16] 0.0, 128
      %637 = vxpose.xlu0.b32.cont [10/16] 0.0, 128
      %638 = vxpose.xlu0.b32.cont [11/16] 0.0, 128
      %639 = vxpose.xlu0.b32.cont [12/16] 0.0, 128
      %640 = vxpose.xlu0.b32.cont [13/16] 0.0, 128
      %641 = vxpose.xlu0.b32.cont [14/16] 0.0, 128
      %642 = vxpose.xlu0.b32.cont [15/16] 0.0, 128
      %643 = vxpose.xlu0.b32.end [16/16] 0.0, 128
      %v644 = vpop.trf.xlu0
      %v645 = vpop.trf.xlu0
      %v646 = vpop.trf.xlu0
      %v647 = vpop.trf.xlu0
      %v648 = vpop.trf.xlu0
      %v649 = vpop.trf.xlu0
      %v650 = vpop.trf.xlu0
      %v651 = vpop.trf.xlu0
      %v652 = vpop.trf.xlu0
      %v653 = vpop.trf.xlu0
      %v654 = vpop.trf.xlu0
      %v655 = vpop.trf.xlu0
      %v656 = vpop.trf.xlu0
      %v657 = vpop.trf.xlu0
      %v658 = vpop.trf.xlu0
      %v659 = vpop.trf.xlu0
      %v661 = vsel %vm484, %v644, 0
      %663 = vmatprep.subr.mxu0 0.0
      %664 = vmatpush1.msra.mxu0 %v474
      %665 = vmatprep.subr.mxu0 0.0
      %666 = vmatpush1.msra.mxu0 %v475
      %667 = vmatprep.subr.mxu0 0.0
      %668 = vmatpush1.msra.mxu0 0.0
      %669 = vmatprep.subr.mxu0 0.0
      %670 = vmatpush1.msra.mxu0 0.0
      %671 = vmatprep.subr.mxu0 0.0
      %672 = vmatpush1.msra.mxu0 0.0
      %673 = vmatprep.subr.mxu0 0.0
      %674 = vmatpush1.msra.mxu0 0.0
      %675 = vmatprep.subr.mxu0 0.0
      %676 = vmatpush1.msra.mxu0 0.0
      %677 = vmatprep.subr.mxu0 0.0
      %678 = vmatpush1.msra.mxu0 0.0
      %679 = vmatprep.subr.mxu0 0.0
      %680 = vmatpush1.msra.mxu0 0.0
      %681 = vmatprep.subr.mxu0 0.0
      %682 = vmatpush1.msra.mxu0 0.0
      %683 = vmatprep.subr.mxu0 0.0
      %684 = vmatpush1.msra.mxu0 0.0
      %685 = vmatprep.subr.mxu0 0.0
      %686 = vmatpush1.msra.mxu0 0.0
      %687 = vmatprep.subr.mxu0 0.0
      %688 = vmatpush1.msra.mxu0 0.0
      %689 = vmatprep.subr.mxu0 0.0
      %690 = vmatpush1.msra.mxu0 0.0
      %691 = vmatprep.subr.mxu0 0.0
      %692 = vmatpush1.msra.mxu0 0.0
      %693 = vmatprep.subr.mxu0 0.0
      %694 = vmatpush1.msra.mxu0 0.0
      %695 = vmatprep.subr.mxu0 0.0
      %696 = vmatpush1.msra.mxu0 0.0
      %697 = vmatprep.subr.mxu0 0.0
      %698 = vmatpush1.msra.mxu0 0.0
      %699 = vmatprep.subr.mxu0 0.0
      %700 = vmatpush1.msra.mxu0 0.0
      %701 = vmatprep.subr.mxu0 0.0
      %702 = vmatpush1.msra.mxu0 0.0
      %703 = vmatprep.subr.mxu0 0.0
      %704 = vmatpush1.msra.mxu0 0.0
      %705 = vmatprep.subr.mxu0 0.0
      %706 = vmatpush1.msra.mxu0 0.0
      %707 = vmatprep.subr.mxu0 0.0
      %708 = vmatpush1.msra.mxu0 0.0
      %709 = vmatprep.subr.mxu0 0.0
      %710 = vmatpush1.msra.mxu0 0.0
      %711 = vmatprep.subr.mxu0 0.0
      %712 = vmatpush1.msra.mxu0 0.0
      %713 = vmatprep.subr.mxu0 0.0
      %714 = vmatpush1.msra.mxu0 0.0
      %715 = vmatprep.subr.mxu0 0.0
      %716 = vmatpush1.msra.mxu0 0.0
      %717 = vmatprep.subr.mxu0 0.0
      %718 = vmatpush1.msra.mxu0 0.0
      %719 = vmatprep.subr.mxu0 0.0
      %720 = vmatpush1.msra.mxu0 0.0
      %721 = vmatprep.subr.mxu0 0.0
      %722 = vmatpush1.msra.mxu0 0.0
      %723 = vmatprep.subr.mxu0 0.0
      %724 = vmatpush1.msra.mxu0 0.0
      %725 = vmatprep.subr.mxu0 0.0
      %726 = vmatpush1.msra.mxu0 0.0
      %727 = vmatprep.mubr.f32.mxu0 0.0
      %728 = vmatmul.mubr.f32.gmra.mrb[0].mxu0 %v661
      %v729 = vpop.f32.mrb[0].mxu0
      %v730 = vadd.f32 0.0, %v729
      %v731 = vpop.f32.mrb[0].mxu0
      %732 = vdwg.mxu0
      %734 = vset.pattern.permute.xlu0 0
      %735 = vperm.xlu0 %734, %v625
      %v736 = vpop.permute.xlu0 %735
      %v739 = vlaneseq
      %v740 = vshrl.u32 %v739, 7
      %v741 = vsub.s32 0, %v740
      %v742 = vrot.slane %v477, %v741
      %v744 = vmul.f32 %v736, %v742
      %v746 = vsel %vm484, %v555, 0
      %748 = vmatprep.subr.mxu0 0.0
      %749 = vmatpush1.msra.mxu0 %v474
      %750 = vmatprep.subr.mxu0 0.0
      %751 = vmatpush1.msra.mxu0 %v475
      %752 = vmatprep.subr.mxu0 0.0
      %753 = vmatpush1.msra.mxu0 0.0
      %754 = vmatprep.subr.mxu0 0.0
      %755 = vmatpush1.msra.mxu0 0.0
      %756 = vmatprep.subr.mxu0 0.0
      %757 = vmatpush1.msra.mxu0 0.0
      %758 = vmatprep.subr.mxu0 0.0
      %759 = vmatpush1.msra.mxu0 0.0
      %760 = vmatprep.subr.mxu0 0.0
      %761 = vmatpush1.msra.mxu0 0.0
      %762 = vmatprep.subr.mxu0 0.0
      %763 = vmatpush1.msra.mxu0 0.0
      %764 = vmatprep.subr.mxu0 0.0
      %765 = vmatpush1.msra.mxu0 0.0
      %766 = vmatprep.subr.mxu0 0.0
      %767 = vmatpush1.msra.mxu0 0.0
      %768 = vmatprep.subr.mxu0 0.0
      %769 = vmatpush1.msra.mxu0 0.0
      %770 = vmatprep.subr.mxu0 0.0
      %771 = vmatpush1.msra.mxu0 0.0
      %772 = vmatprep.subr.mxu0 0.0
      %773 = vmatpush1.msra.mxu0 0.0
      %774 = vmatprep.subr.mxu0 0.0
      %775 = vmatpush1.msra.mxu0 0.0
      %776 = vmatprep.subr.mxu0 0.0
      %777 = vmatpush1.msra.mxu0 0.0
      %778 = vmatprep.subr.mxu0 0.0
      %779 = vmatpush1.msra.mxu0 0.0
      %780 = vmatprep.subr.mxu0 0.0
      %781 = vmatpush1.msra.mxu0 0.0
      %782 = vmatprep.subr.mxu0 0.0
      %783 = vmatpush1.msra.mxu0 0.0
      %784 = vmatprep.subr.mxu0 0.0
      %785 = vmatpush1.msra.mxu0 0.0
      %786 = vmatprep.subr.mxu0 0.0
      %787 = vmatpush1.msra.mxu0 0.0
      %788 = vmatprep.subr.mxu0 0.0
      %789 = vmatpush1.msra.mxu0 0.0
      %790 = vmatprep.subr.mxu0 0.0
      %791 = vmatpush1.msra.mxu0 0.0
      %792 = vmatprep.subr.mxu0 0.0
      %793 = vmatpush1.msra.mxu0 0.0
      %794 = vmatprep.subr.mxu0 0.0
      %795 = vmatpush1.msra.mxu0 0.0
      %796 = vmatprep.subr.mxu0 0.0
      %797 = vmatpush1.msra.mxu0 0.0
      %798 = vmatprep.subr.mxu0 0.0
      %799 = vmatpush1.msra.mxu0 0.0
      %800 = vmatprep.subr.mxu0 0.0
      %801 = vmatpush1.msra.mxu0 0.0
      %802 = vmatprep.subr.mxu0 0.0
      %803 = vmatpush1.msra.mxu0 0.0
      %804 = vmatprep.subr.mxu0 0.0
      %805 = vmatpush1.msra.mxu0 0.0
      %806 = vmatprep.subr.mxu0 0.0
      %807 = vmatpush1.msra.mxu0 0.0
      %808 = vmatprep.subr.mxu0 0.0
      %809 = vmatpush1.msra.mxu0 0.0
      %810 = vmatprep.subr.mxu0 0.0
      %811 = vmatpush1.msra.mxu0 0.0
      %812 = vmatprep.mubr.f32.mxu0 0.0
      %813 = vmatmul.mubr.f32.gmra.mrb[0].mxu0 %v746
      %v814 = vpop.f32.mrb[0].mxu0
      %v815 = vadd.f32 %v744, %v814
      %v816 = vpop.f32.mrb[0].mxu0
      %817 = vdwg.mxu0
      %819 = vset.pattern.permute.xlu0 0
      %820 = vperm.xlu0 %819, %v476
      %v821 = vpop.permute.xlu0 %820
      %v823 = vlaneseq
      %v824 = vshrl.u32 %v823, 7
      %v825 = vsub.s32 0, %v824
      %v826 = vrot.slane %v730, %v825
      %v827 = vmul.f32 %v821, %v826
      %v828 = vadd.f32 %v815, %v827
      %v829 = vadd.f32 %v828, %v478
      %vm830 = vcmask 64512
      %v831 = vsel %vm830, %v829, -inf
      %832 = vmax.xlane.f32.xlu0 %v831
      %v833 = vpop.xlane.xlu0 %832
      %v834 = vsub.f32 %v829, %v833
      %v835 = vmul.f32 %v834, 1.442695
      %v836 = vpow.pop %v835
      %v837 = vsel %vm830, %v836, 0.0
      %838 = vadd.xlane.f32.xlu0 %v837
      %v839 = vpop.xlane.xlu0 %838
      %v840 = vrcp.pop %v839
      %v841 = vmul.f32 %v836, %v840
      %v843 = vsel %vm830, %v841, 0
      %845 = vmatprep.subr.mxu0 0.0
      %846 = vmatpush1.msra.mxu0 %v480
      %847 = vmatprep.subr.mxu0 0.0
      %848 = vmatpush1.msra.mxu0 0.0
      %849 = vmatprep.subr.mxu0 0.0
      %850 = vmatpush1.msra.mxu0 0.0
      %851 = vmatprep.subr.mxu0 0.0
      %852 = vmatpush1.msra.mxu0 0.0
      %853 = vmatprep.subr.mxu0 0.0
      %854 = vmatpush1.msra.mxu0 0.0
      %855 = vmatprep.subr.mxu0 0.0
      %856 = vmatpush1.msra.mxu0 0.0
      %857 = vmatprep.subr.mxu0 0.0
      %858 = vmatpush1.msra.mxu0 0.0
      %859 = vmatprep.subr.mxu0 0.0
      %860 = vmatpush1.msra.mxu0 0.0
      %861 = vmatprep.subr.mxu0 0.0
      %862 = vmatpush1.msra.mxu0 0.0
      %863 = vmatprep.subr.mxu0 0.0
      %864 = vmatpush1.msra.mxu0 0.0
      %865 = vmatprep.subr.mxu0 0.0
      %866 = vmatpush1.msra.mxu0 0.0
      %867 = vmatprep.subr.mxu0 0.0
      %868 = vmatpush1.msra.mxu0 0.0
      %869 = vmatprep.subr.mxu0 0.0
      %870 = vmatpush1.msra.mxu0 0.0
      %871 = vmatprep.subr.mxu0 0.0
      %872 = vmatpush1.msra.mxu0 0.0
      %873 = vmatprep.subr.mxu0 0.0
      %874 = vmatpush1.msra.mxu0 0.0
      %875 = vmatprep.subr.mxu0 0.0
      %876 = vmatpush1.msra.mxu0 0.0
      %877 = vmatprep.subr.mxu0 0.0
      %878 = vmatpush1.msra.mxu0 0.0
      %879 = vmatprep.subr.mxu0 0.0
      %880 = vmatpush1.msra.mxu0 0.0
      %881 = vmatprep.subr.mxu0 0.0
      %882 = vmatpush1.msra.mxu0 0.0
      %883 = vmatprep.subr.mxu0 0.0
      %884 = vmatpush1.msra.mxu0 0.0
      %885 = vmatprep.subr.mxu0 0.0
      %886 = vmatpush1.msra.mxu0 0.0
      %887 = vmatprep.subr.mxu0 0.0
      %888 = vmatpush1.msra.mxu0 0.0
      %889 = vmatprep.subr.mxu0 0.0
      %890 = vmatpush1.msra.mxu0 0.0
      %891 = vmatprep.subr.mxu0 0.0
      %892 = vmatpush1.msra.mxu0 0.0
      %893 = vmatprep.subr.mxu0 0.0
      %894 = vmatpush1.msra.mxu0 0.0
      %895 = vmatprep.subr.mxu0 0.0
      %896 = vmatpush1.msra.mxu0 0.0
      %897 = vmatprep.subr.mxu0 0.0
      %898 = vmatpush1.msra.mxu0 0.0
      %899 = vmatprep.subr.mxu0 0.0
      %900 = vmatpush1.msra.mxu0 0.0
      %901 = vmatprep.subr.mxu0 0.0
      %902 = vmatpush1.msra.mxu0 0.0
      %903 = vmatprep.subr.mxu0 0.0
      %904 = vmatpush1.msra.mxu0 0.0
      %905 = vmatprep.subr.mxu0 0.0
      %906 = vmatpush1.msra.mxu0 0.0
      %907 = vmatprep.subr.mxu0 0.0
      %908 = vmatpush1.msra.mxu0 0.0
      %909 = vmatprep.mubr.f32.mxu0 0.0
      %910 = vmatmul.mubr.f32.gmra.mrb[0].mxu0 %v843
      %v911 = vpop.f32.mrb[0].mxu0
      %v912 = vadd.f32 0.0, %v911
      %v913 = vpop.f32.mrb[0].mxu0
      %914 = vdwg.mxu0
      %915 = vxpose.xlu0.b32.start [1/16] %v912, 128
      %916 = vxpose.xlu0.b32.cont [2/16] 0.0, 128
      %917 = vxpose.xlu0.b32.cont [3/16] 0.0, 128
      %918 = vxpose.xlu0.b32.cont [4/16] 0.0, 128
      %919 = vxpose.xlu0.b32.cont [5/16] 0.0, 128
      %920 = vxpose.xlu0.b32.cont [6/16] 0.0, 128
      %921 = vxpose.xlu0.b32.cont [7/16] 0.0, 128
      %922 = vxpose.xlu0.b32.cont [8/16] 0.0, 128
      %923 = vxpose.xlu0.b32.cont [9/16] 0.0, 128
      %924 = vxpose.xlu0.b32.cont [10/16] 0.0, 128
      %925 = vxpose.xlu0.b32.cont [11/16] 0.0, 128
      %926 = vxpose.xlu0.b32.cont [12/16] 0.0, 128
      %927 = vxpose.xlu0.b32.cont [13/16] 0.0, 128
      %928 = vxpose.xlu0.b32.cont [14/16] 0.0, 128
      %929 = vxpose.xlu0.b32.cont [15/16] 0.0, 128
      %930 = vxpose.xlu0.b32.end [16/16] 0.0, 128
      %v931 = vpop.trf.xlu0
      %v932 = vpop.trf.xlu0
      %v933 = vpop.trf.xlu0
      %v934 = vpop.trf.xlu0
      %v935 = vpop.trf.xlu0
      %v936 = vpop.trf.xlu0
      %v937 = vpop.trf.xlu0
      %v938 = vpop.trf.xlu0
      %v939 = vpop.trf.xlu0
      %v940 = vpop.trf.xlu0
      %v941 = vpop.trf.xlu0
      %v942 = vpop.trf.xlu0
      %v943 = vpop.trf.xlu0
      %v944 = vpop.trf.xlu0
      %v945 = vpop.trf.xlu0
      %v946 = vpop.trf.xlu0
      %v948 = vsel %vm830, %v931, 0
      %v951 = vsel %vm830, %v932, 0
      %953 = vmatprep.subr.mxu0 0.0
      %954 = vmatpush1.msra.mxu0 %v479
      %955 = vmatprep.subr.mxu0 0.0
      %956 = vmatpush1.msra.mxu0 0.0
      %957 = vmatprep.subr.mxu0 0.0
      %958 = vmatpush1.msra.mxu0 0.0
      %959 = vmatprep.subr.mxu0 0.0
      %960 = vmatpush1.msra.mxu0 0.0
      %961 = vmatprep.subr.mxu0 0.0
      %962 = vmatpush1.msra.mxu0 0.0
      %963 = vmatprep.subr.mxu0 0.0
      %964 = vmatpush1.msra.mxu0 0.0
      %965 = vmatprep.subr.mxu0 0.0
      %966 = vmatpush1.msra.mxu0 0.0
      %967 = vmatprep.subr.mxu0 0.0
      %968 = vmatpush1.msra.mxu0 0.0
      %969 = vmatprep.subr.mxu0 0.0
      %970 = vmatpush1.msra.mxu0 0.0
      %971 = vmatprep.subr.mxu0 0.0
      %972 = vmatpush1.msra.mxu0 0.0
      %973 = vmatprep.subr.mxu0 0.0
      %974 = vmatpush1.msra.mxu0 0.0
      %975 = vmatprep.subr.mxu0 0.0
      %976 = vmatpush1.msra.mxu0 0.0
      %977 = vmatprep.subr.mxu0 0.0
      %978 = vmatpush1.msra.mxu0 0.0
      %979 = vmatprep.subr.mxu0 0.0
      %980 = vmatpush1.msra.mxu0 0.0
      %981 = vmatprep.subr.mxu0 0.0
      %982 = vmatpush1.msra.mxu0 0.0
      %983 = vmatprep.subr.mxu0 0.0
      %984 = vmatpush1.msra.mxu0 0.0
      %985 = vmatprep.subr.mxu0 0.0
      %986 = vmatpush1.msra.mxu0 0.0
      %987 = vmatprep.subr.mxu0 0.0
      %988 = vmatpush1.msra.mxu0 0.0
      %989 = vmatprep.subr.mxu0 0.0
      %990 = vmatpush1.msra.mxu0 0.0
      %991 = vmatprep.subr.mxu0 0.0
      %992 = vmatpush1.msra.mxu0 0.0
      %993 = vmatprep.subr.mxu0 0.0
      %994 = vmatpush1.msra.mxu0 0.0
      %995 = vmatprep.subr.mxu0 0.0
      %996 = vmatpush1.msra.mxu0 0.0
      %997 = vmatprep.subr.mxu0 0.0
      %998 = vmatpush1.msra.mxu0 0.0
      %999 = vmatprep.subr.mxu0 0.0
      %1000 = vmatpush1.msra.mxu0 0.0
      %1001 = vmatprep.subr.mxu0 0.0
      %1002 = vmatpush1.msra.mxu0 0.0
      %1003 = vmatprep.subr.mxu0 0.0
      %1004 = vmatpush1.msra.mxu0 0.0
      %1005 = vmatprep.subr.mxu0 0.0
      %1006 = vmatpush1.msra.mxu0 0.0
      %1007 = vmatprep.subr.mxu0 0.0
      %1008 = vmatpush1.msra.mxu0 0.0
      %1009 = vmatprep.subr.mxu0 0.0
      %1010 = vmatpush1.msra.mxu0 0.0
      %1011 = vmatprep.subr.mxu0 0.0
      %1012 = vmatpush1.msra.mxu0 0.0
      %1013 = vmatprep.subr.mxu0 0.0
      %1014 = vmatpush1.msra.mxu0 0.0
      %1015 = vmatprep.subr.mxu0 0.0
      %1016 = vmatpush1.msra.mxu0 0.0
      %1017 = vmatprep.mubr.f32.mxu0 0.0
      %1018 = vmatmul.mubr.f32.gmra.mrb[0].mxu0 %v948
      %v1019 = vpop.f32.mrb[0].mxu0
      %v1020 = vadd.f32 0.0, %v1019
      %v1021 = vpop.f32.mrb[0].mxu0
      %1022 = vmatprep.mubr.f32.mxu0 0.0
      %1023 = vmatmul.mubr.f32.gmra.mrb[0].mxu0 %v951
      %v1024 = vpop.f32.mrb[0].mxu0
      %v1025 = vadd.f32 0.0, %v1024
      %v1026 = vpop.f32.mrb[0].mxu0
      %1027 = vdwg.mxu0
      %1028 = vmatprep.subr.mxu0 0.0
      %1029 = vmatpush1.msra.mxu0 %v481
      %1030 = vmatprep.subr.mxu0 0.0
      %1031 = vmatpush1.msra.mxu0 0.0
      %1032 = vmatprep.subr.mxu0 0.0
      %1033 = vmatpush1.msra.mxu0 0.0
      %1034 = vmatprep.subr.mxu0 0.0
      %1035 = vmatpush1.msra.mxu0 0.0
      %1036 = vmatprep.subr.mxu0 0.0
      %1037 = vmatpush1.msra.mxu0 0.0
      %1038 = vmatprep.subr.mxu0 0.0
      %1039 = vmatpush1.msra.mxu0 0.0
      %1040 = vmatprep.subr.mxu0 0.0
      %1041 = vmatpush1.msra.mxu0 0.0
      %1042 = vmatprep.subr.mxu0 0.0
      %1043 = vmatpush1.msra.mxu0 0.0
      %1044 = vmatprep.subr.mxu0 0.0
      %1045 = vmatpush1.msra.mxu0 0.0
      %1046 = vmatprep.subr.mxu0 0.0
      %1047 = vmatpush1.msra.mxu0 0.0
      %1048 = vmatprep.subr.mxu0 0.0
      %1049 = vmatpush1.msra.mxu0 0.0
      %1050 = vmatprep.subr.mxu0 0.0
      %1051 = vmatpush1.msra.mxu0 0.0
      %1052 = vmatprep.subr.mxu0 0.0
      %1053 = vmatpush1.msra.mxu0 0.0
      %1054 = vmatprep.subr.mxu0 0.0
      %1055 = vmatpush1.msra.mxu0 0.0
      %1056 = vmatprep.subr.mxu0 0.0
      %1057 = vmatpush1.msra.mxu0 0.0
      %1058 = vmatprep.subr.mxu0 0.0
      %1059 = vmatpush1.msra.mxu0 0.0
      %1060 = vmatprep.subr.mxu0 0.0
      %1061 = vmatpush1.msra.mxu0 0.0
      %1062 = vmatprep.subr.mxu0 0.0
      %1063 = vmatpush1.msra.mxu0 0.0
      %1064 = vmatprep.subr.mxu0 0.0
      %1065 = vmatpush1.msra.mxu0 0.0
      %1066 = vmatprep.subr.mxu0 0.0
      %1067 = vmatpush1.msra.mxu0 0.0
      %1068 = vmatprep.subr.mxu0 0.0
      %1069 = vmatpush1.msra.mxu0 0.0
      %1070 = vmatprep.subr.mxu0 0.0
      %1071 = vmatpush1.msra.mxu0 0.0
      %1072 = vmatprep.subr.mxu0 0.0
      %1073 = vmatpush1.msra.mxu0 0.0
      %1074 = vmatprep.subr.mxu0 0.0
      %1075 = vmatpush1.msra.mxu0 0.0
      %1076 = vmatprep.subr.mxu0 0.0
      %1077 = vmatpush1.msra.mxu0 0.0
      %1078 = vmatprep.subr.mxu0 0.0
      %1079 = vmatpush1.msra.mxu0 0.0
      %1080 = vmatprep.subr.mxu0 0.0
      %1081 = vmatpush1.msra.mxu0 0.0
      %1082 = vmatprep.subr.mxu0 0.0
      %1083 = vmatpush1.msra.mxu0 0.0
      %1084 = vmatprep.subr.mxu0 0.0
      %1085 = vmatpush1.msra.mxu0 0.0
      %1086 = vmatprep.subr.mxu0 0.0
      %1087 = vmatpush1.msra.mxu0 0.0
      %1088 = vmatprep.subr.mxu0 0.0
      %1089 = vmatpush1.msra.mxu0 0.0
      %1090 = vmatprep.subr.mxu0 0.0
      %1091 = vmatpush1.msra.mxu0 0.0
      %1092 = vmatprep.mubr.f32.mxu0 0.0
      %1093 = vmatmul.mubr.f32.gmra.mrb[0].mxu0 %v948
      %v1094 = vpop.f32.mrb[0].mxu0
      %v1095 = vadd.f32 %v482, %v1094
      %v1096 = vpop.f32.mrb[0].mxu0
      %1097 = vmatprep.mubr.f32.mxu0 0.0
      %1098 = vmatmul.mubr.f32.gmra.mrb[0].mxu0 %v951
      %v1099 = vpop.f32.mrb[0].mxu0
      %v1100 = vadd.f32 %v483, %v1099
      %v1101 = vpop.f32.mrb[0].mxu0
      %1102 = vdwg.mxu0
      %1104 = vset.pattern.permute.xlu0 0
      %1105 = vperm.xlu0 %1104, %v1095
      %v1106 = vpop.permute.xlu0 %1105
      %1109 = vset.pattern.permute.xlu0 0
      %1110 = vperm.xlu0 %1109, %v1100
      %v1111 = vpop.permute.xlu0 %1110
      %v1114 = vsel %vm484, %v1020, 0
      %v1117 = vsel %vm484, %v1025, 0
      %1119 = vmatprep.subr.mxu0 %v389
      %1120 = vmatpush1.msra.mxu0 %v388
      %1121 = vmatprep.subr.mxu0 %v391
      %1122 = vmatpush1.msra.mxu0 %v390
      %1123 = vmatprep.subr.mxu0 0.0
      %1124 = vmatpush1.msra.mxu0 0.0
      %1125 = vmatprep.subr.mxu0 0.0
      %1126 = vmatpush1.msra.mxu0 0.0
      %1127 = vmatprep.subr.mxu0 0.0
      %1128 = vmatpush1.msra.mxu0 0.0
      %1129 = vmatprep.subr.mxu0 0.0
      %1130 = vmatpush1.msra.mxu0 0.0
      %1131 = vmatprep.subr.mxu0 0.0
      %1132 = vmatpush1.msra.mxu0 0.0
      %1133 = vmatprep.subr.mxu0 0.0
      %1134 = vmatpush1.msra.mxu0 0.0
      %1135 = vmatprep.subr.mxu0 0.0
      %1136 = vmatpush1.msra.mxu0 0.0
      %1137 = vmatprep.subr.mxu0 0.0
      %1138 = vmatpush1.msra.mxu0 0.0
      %1139 = vmatprep.subr.mxu0 0.0
      %1140 = vmatpush1.msra.mxu0 0.0
      %1141 = vmatprep.subr.mxu0 0.0
      %1142 = vmatpush1.msra.mxu0 0.0
      %1143 = vmatprep.subr.mxu0 0.0
      %1144 = vmatpush1.msra.mxu0 0.0
      %1145 = vmatprep.subr.mxu0 0.0
      %1146 = vmatpush1.msra.mxu0 0.0
      %1147 = vmatprep.subr.mxu0 0.0
      %1148 = vmatpush1.msra.mxu0 0.0
      %1149 = vmatprep.subr.mxu0 0.0
      %1150 = vmatpush1.msra.mxu0 0.0
      %1151 = vmatprep.subr.mxu0 0.0
      %1152 = vmatpush1.msra.mxu0 0.0
      %1153 = vmatprep.subr.mxu0 0.0
      %1154 = vmatpush1.msra.mxu0 0.0
      %1155 = vmatprep.subr.mxu0 0.0
      %1156 = vmatpush1.msra.mxu0 0.0
      %1157 = vmatprep.subr.mxu0 0.0
      %1158 = vmatpush1.msra.mxu0 0.0
      %1159 = vmatprep.subr.mxu0 0.0
      %1160 = vmatpush1.msra.mxu0 0.0
      %1161 = vmatprep.subr.mxu0 0.0
      %1162 = vmatpush1.msra.mxu0 0.0
      %1163 = vmatprep.subr.mxu0 0.0
      %1164 = vmatpush1.msra.mxu0 0.0
      %1165 = vmatprep.subr.mxu0 0.0
      %1166 = vmatpush1.msra.mxu0 0.0
      %1167 = vmatprep.subr.mxu0 0.0
      %1168 = vmatpush1.msra.mxu0 0.0
      %1169 = vmatprep.subr.mxu0 0.0
      %1170 = vmatpush1.msra.mxu0 0.0
      %1171 = vmatprep.subr.mxu0 0.0
      %1172 = vmatpush1.msra.mxu0 0.0
      %1173 = vmatprep.subr.mxu0 0.0
      %1174 = vmatpush1.msra.mxu0 0.0
      %1175 = vmatprep.subr.mxu0 0.0
      %1176 = vmatpush1.msra.mxu0 0.0
      %1177 = vmatprep.subr.mxu0 0.0
      %1178 = vmatpush1.msra.mxu0 0.0
      %1179 = vmatprep.subr.mxu0 0.0
      %1180 = vmatpush1.msra.mxu0 0.0
      %1181 = vmatprep.subr.mxu0 0.0
      %1182 = vmatpush1.msra.mxu0 0.0
      %1183 = vmatprep.mubr.f32.mxu0 0.0
      %1184 = vmatmul.mubr.f32.gmra.mrb[0].mxu0 %v1114
      %v1185 = vpop.f32.mrb[0].mxu0
      %v1186 = vadd.f32 %v1106, %v1185
      %v1187 = vpop.f32.mrb[0].mxu0
      %v1188 = vadd.f32 %v1106, %v1187
      %1189 = vmatprep.mubr.f32.mxu0 0.0
      %1190 = vmatmul.mubr.f32.gmra.mrb[0].mxu0 %v1117
      %v1191 = vpop.f32.mrb[0].mxu0
      %v1192 = vadd.f32 %v1111, %v1191
      %v1193 = vpop.f32.mrb[0].mxu0
      %v1194 = vadd.f32 %v1111, %v1193
      %1195 = vdwg.mxu0
      %vm1196 = vcmp.gt.f32.partialorder %v1186, 0.0
      %vm1197 = vcmp.gt.f32.partialorder %v1188, 0.0
      %vm1198 = vcmp.gt.f32.partialorder %v1192, 0.0
      %vm1199 = vcmp.gt.f32.partialorder %v1194, 0.0
      %v1200 = vmul.f32 %v1186, 0.01
      %v1201 = vmul.f32 %v1188, 0.01
      %v1202 = vmul.f32 %v1192, 0.01
      %v1203 = vmul.f32 %v1194, 0.01
      %v1204 = vsel %vm1196, %v1186, %v1200
      %v1205 = vsel %vm1197, %v1188, %v1201
      %v1206 = vsel %vm1198, %v1192, %v1202
      %v1207 = vsel %vm1199, %v1194, %v1203
      %s1208 = sld [smem:[#allocation2]]
      %v1209 = vstv %s1208
      %v1210 = vmul.f32 %v1209, %v1204
      %v1211 = vmul.f32 %v1209, %v1205
      %v1212 = vmul.f32 %v1209, %v1206
      %v1213 = vmul.f32 %v1209, %v1207
      %v1214 = vadd.f32 %v1210, %v388
      %v1215 = vadd.f32 %v1211, %v389
      %v1216 = vadd.f32 %v1212, %v390
      %v1217 = vadd.f32 %v1213, %v391
      %1218 = vst [vmem:[%s387] sm:$0xff] %v1214
      %1219 = vst [vmem:[%s387 + $0x8] sm:$0xff] %v1215
      %1220 = vst [vmem:[%s387 + $0x10] sm:$0xff] %v1216
      %1221 = vst [vmem:[%s387 + $0x18] sm:$0xff] %v1217
      %p1222 = scmp.lt.s32.totalorder %s23, 1
      %s1223 = scalar_select %p1222, %s23, 1
      %s1224 = smul.addr %s1223, 4
      %s1225 = smul.addr %s1224, 8
      %s1226 = scalar_lea.vmem %s11, %s1225
      // Predicated region
      $region65: #{spatial_gcn_pallas.1} parent=63 // pred_check
        %p1227 = pneg %p277
      $region66: #{spatial_gcn_pallas.1} parent=63 // pred_check_branch
        %1229 = sbr.rel (%p1227) target = $region68
      $region67: #{spatial_gcn_pallas.1} parent=63 // pred_region
        _
      $region68: #{spatial_gcn_pallas.1} parent=63 // pred_fallthru
        _
    $region64: #{spatial_gcn_pallas.1} parent=5 // pred_fallthru
      _
    %p1230 = scmp.le.s32.totalorder 2, %s18
    // Predicated region
    $region69: #{spatial_gcn_pallas.1} parent=5 // pred_check
      %p1231 = pneg %p1230
    $region70: #{spatial_gcn_pallas.1} parent=5 // pred_check_branch
      %1233 = sbr.rel (%p1231) target = $region72
    $region71: #{spatial_gcn_pallas.1} parent=5 // pred_region
      %s1234 = ssub.s32 %s18, 2
      // Predicated region
      $region73: #{spatial_gcn_pallas.1} parent=71 // pred_check
        %p1235 = pneg %p283
      $region74: #{spatial_gcn_pallas.1} parent=71 // pred_check_branch
        %1237 = sbr.rel (%p1235) target = $region76
      $region75: #{spatial_gcn_pallas.1} parent=71 // pred_region
        %p1238 = scmp.lt.s32.totalorder %s24, 1
        %s1239 = scalar_select %p1238, %s24, 1
        %s1240 = smul.addr %s1239, 4
        %s1241 = smul.addr %s1240, 8
        %s1242 = scalar_lea.vmem %s11, %s1241
      $region76: #{spatial_gcn_pallas.1} parent=71 // pred_fallthru
        _
    $region72: #{spatial_gcn_pallas.1} parent=5 // pred_fallthru
      _
  $region6: #{spatial_gcn_pallas.1} parent=0 // loop_footer
    %s22 = sadd.s32 1, %s18
  $region7: #{spatial_gcn_pallas.1} parent=0 // loop_footer_branch
    %17 = sbr.rel target = $region3
  $region8: #{spatial_gcn_pallas.1} parent=0 // loop_exit
    _

</llo_original>
